<compile_context>
chip_gen: v7x
topology: tpu7x:2x2x1
jax: 0.10.0
libtpu: 0.0.40
codegen_flags: <defaults>
</compile_context>

<pallas_src>
import jax
import jax.numpy as jnp
from jax import lax
from jax.experimental import pallas as pl
from jax.experimental.pallas import tpu as pltpu

K = 7        # conv kernel size
PAD = 3      # conv padding


def _chip_info():
    """Return (per-core VMEM bytes, keep >=2 parallel grid steps for 2 TCs)."""
    vmem = 0
    try:
        vmem = int(pltpu.get_tpu_info().vmem_capacity_bytes)
    except Exception:
        vmem = 0
    kind = ""
    try:
        kind = jax.devices()[0].device_kind.lower()
    except Exception:
        kind = ""
    if vmem <= 0:
        vmem = (64 << 20) if "v7" in kind else (128 << 20)
    multi_tc = ("v7" in kind) or vmem <= (64 << 20)
    return vmem, multi_tc


def _chunk_c(C):
    """Channel chunking: (chunk, n_full_chunks, tail). Chunk starts stay
    16-aligned (sublane friendly); the tail is handled as one static chunk."""
    cb = C if C <= 16 else 16
    return cb, C // cb, C % cb


def _pick_bb(B, per_image_bytes, HW, target_bytes, multi_tc):
    """Batch images per grid step."""
    bb = max(1, min(B, target_bytes // max(per_image_bytes, 1)))
    # Keep the conv/reduction working set (a few (Bb, HW) f32 maps) mostly in
    # the 64-vreg file; otherwise the 49-tap conv becomes a VMEM-streaming loop.
    bb = min(bb, max(1, 16384 // max(HW, 1)))
    if multi_tc and B >= 2:
        bb = min(bb, max(1, B // 2))    # feed both TensorCores (v7x)
    while B % bb:                        # bb must divide B
        bb -= 1
    return bb


def _make_kernel(Bb, C, H, W, CB, NF, REM):
    HW = H * W
    HP = H + 2 * PAD
    L = HP * W + 2 * PAD          # flat padded map length (vertical zero rows)
    OFF = PAD * W + PAD           # flat index of map element (0, 0)
    unroll = NF if NF <= 8 else 4

    def kernel(w_ref, b_ref, x_ref, o_ref, pad_a_ref, pad_m_ref):
        # x_ref / o_ref: (Bb, C, HW) blocks in VMEM (lane-dense last dim).
        # w_ref: (98,) f32 SMEM (idx = in_ch*49 + kh*7 + kw), b_ref: (1,) SMEM.
        # pad_a_ref / pad_m_ref: (Bb, L) f32 flat, vertically zero-padded maps.

        # ---- channel mean / max, streamed over aligned C chunks ----
        def red_body(i, carry):
            s, m = carry
            sl = pl.ds(pl.multiple_of(i * CB, CB), CB)
            xc = x_ref[:, sl, :].astype(jnp.float32)          # (Bb, CB, HW)
            return s + jnp.sum(xc, axis=1), jnp.maximum(m, jnp.max(xc, axis=1))

        s0 = jnp.zeros((Bb, HW), jnp.float32)
        m0 = jnp.full((Bb, HW), -jnp.inf, jnp.float32)
        s, mx = lax.fori_loop(0, NF, red_body, (s0, m0), unroll=unroll)
        if REM:                                               # static tail chunk
            xt = x_ref[:, NF * CB:NF * CB + REM, :].astype(jnp.float32)
            s = s + jnp.sum(xt, axis=1)
            mx = jnp.maximum(mx, jnp.max(xt, axis=1))
        avg = s * (1.0 / C)                                   # (Bb, HW)

        # ---- flat padded maps: zero fill + ONE bulk store per map ----
        pad_a_ref[...] = jnp.zeros((Bb, L), jnp.float32)
        pad_m_ref[...] = jnp.zeros((Bb, L), jnp.float32)
        pad_a_ref[:, OFF:OFF + HW] = avg
        pad_m_ref[:, OFF:OFF + HW] = mx

        # ---- 7x7 conv on the lane-dense flat layout ----
        # Tap (kh, kw) of output pixel k = h*W + w is flat element k + kh*W + kw
        # of the padded map; lanes whose column w + kw - PAD falls outside
        # [0, W) are zeroed once per kw with a mask select (7 selects total).
        col = lax.broadcasted_iota(jnp.int32, (1, HW), 1) % W
        acc = jnp.zeros((Bb, HW), jnp.float32)
        for kw in range(K):
            part = jnp.zeros((Bb, HW), jnp.float32)
            for kh in range(K):
                start = kh * W + kw
                ta = pad_a_ref[:, start:start + HW]           # avg-channel tap
                tm = pad_m_ref[:, start:start + HW]           # max-channel tap
                part = (part + w_ref[kh * K + kw] * ta
                        + w_ref[K * K + kh * K + kw] * tm)
            lo = max(0, PAD - kw)
            hi = W - max(0, kw - PAD)
            if lo == 0 and hi == W:
                acc = acc + part
            else:
                acc = acc + jnp.where((col >= lo) & (col < hi), part, 0.0)
        attn = jax.nn.sigmoid(acc + b_ref[0]).reshape(Bb, 1, HW)   # f32

        # ---- out = x * attn, streamed over C chunks (f32 math, cast at store)
        def scale_body(i, _):
            sl = pl.ds(pl.multiple_of(i * CB, CB), CB)
            xc = x_ref[:, sl, :].astype(jnp.float32)
            o_ref[:, sl, :] = (xc * attn).astype(o_ref.dtype)
            return 0

        lax.fori_loop(0, NF, scale_body, 0, unroll=unroll)
        if REM:
            xt = x_ref[:, NF * CB:NF * CB + REM, :].astype(jnp.float32)
            o_ref[:, NF * CB:NF * CB + REM, :] = (xt * attn).astype(o_ref.dtype)

    return kernel


def spatial_attention(x, w, b):
    """x: (B, C, H, W) ; w: (1, 2, 7, 7) f32 ; b: (1,) f32"""
    B, C, H, W = x.shape
    HW = H * W
    HP = H + 2 * PAD
    L = HP * W + 2 * PAD

    w_flat = w.reshape(-1).astype(jnp.float32)   # idx = in_ch*49 + kh*7 + kw
    b_flat = b.reshape(-1).astype(jnp.float32)
    x2 = x.reshape(B, C, HW)                     # lane-dense view (free reshape)

    itemsize = x.dtype.itemsize
    per_image = C * HW * itemsize

    vmem_cap, multi_tc = _chip_info()
    target_bytes = max(2 << 20, vmem_cap // 16)   # ~8 MiB @128 MiB, ~4 MiB @64 MiB
    Bb = _pick_bb(B, per_image, HW, target_bytes, multi_tc)
    CB, NF, REM = _chunk_c(C)

    block_bytes = Bb * per_image
    scratch_bytes = 2 * Bb * L * 4
    need = 4 * block_bytes + scratch_bytes + (2 << 20)        # dbl-buffered in+out
    vmem_budget = max(vmem_cap - max(24 << 20, vmem_cap // 4),
                      (3 * vmem_cap) // 8)                    # ~96 MiB / ~40 MiB caps
    if need > vmem_budget:
        # TODO(synk): oversized single-image blocks need a C (or HW) split grid
        # axis with a two-pass reduce+scale (and a conv halo for an HW split).
        raise NotImplementedError(
            f"SpatialAttention block needs ~{need >> 20} MiB VMEM but the "
            f"budget is {vmem_budget >> 20} MiB; C*H*W per image is too large.")
    vmem_limit = int(min(vmem_budget, max(need, 16 << 20)))

    # TODO(synk): when B == 1 on a 2-TensorCore chip (v7x) one core idles; a
    # second parallel grid axis over C or HW would be needed to use both.

    cost = pl.CostEstimate(
        flops=int(B * HW * (3 * C + 4 * K * K + 8)),
        transcendentals=int(B * HW),
        bytes_accessed=int(2 * B * C * HW * itemsize + (2 * K * K + 1) * 4),
    )

    kernel = _make_kernel(Bb, C, H, W, CB, NF, REM)
    out2 = pl.pallas_call(
        kernel,
        out_shape=jax.ShapeDtypeStruct((B, C, HW), x.dtype),
        grid=(B // Bb,),
        in_specs=[
            pl.BlockSpec(memory_space=pltpu.MemorySpace.SMEM),   # conv weights
            pl.BlockSpec(memory_space=pltpu.MemorySpace.SMEM),   # bias
            pl.BlockSpec((Bb, C, HW), lambda i: (i, 0, 0)),      # x block
        ],
        out_specs=pl.BlockSpec((Bb, C, HW), lambda i: (i, 0, 0)),
        scratch_shapes=[
            pltpu.VMEM((Bb, L), jnp.float32),    # flat padded avg map
            pltpu.VMEM((Bb, L), jnp.float32),    # flat padded max map
        ],
        compiler_params=pltpu.CompilerParams(
            dimension_semantics=("parallel",),
            vmem_limit_bytes=vmem_limit,
        ),
        cost_estimate=cost,
    )(w_flat, b_flat, x2)

    return out2.reshape(B, C, H, W)


def spatial_attention_ref(x, w, b):
    """Pure-JAX reference replicating the PyTorch forward exactly."""
    avg = jnp.mean(x, axis=1, keepdims=True)
    mx = jnp.max(x, axis=1, keepdims=True)
    attn = jnp.concatenate([avg, mx], axis=1)         # (B, 2, H, W)
    conv = jax.lax.conv_general_dilated(
        attn, w, window_strides=(1, 1), padding=((PAD, PAD), (PAD, PAD)),
        dimension_numbers=("NCHW", "OIHW", "NCHW"))
    conv = conv + b.reshape(1, 1, 1, 1)
    return x * jax.nn.sigmoid(conv)


if __name__ == "__main__":
    key = jax.random.PRNGKey(0)
    kx, kw, kb = jax.random.split(key, 3)

    B, C, H, W = 2, 4, 16, 16
    x = jax.random.normal(kx, (B, C, H, W), dtype=jnp.float32)
    # Deterministic synthetic parameters (Conv2d(2, 1, kernel_size=7) shapes).
    w = jax.random.normal(kw, (1, 2, K, K), dtype=jnp.float32) * 0.1
    b = jax.random.normal(kb, (1,), dtype=jnp.float32) * 0.1

    out = jax.block_until_ready(spatial_attention(x, w, b))
    ref = jax.block_until_ready(spatial_attention_ref(x, w, b))

    assert out.shape == x.shape and out.dtype == x.dtype
    assert jnp.allclose(out, ref, atol=1e-5, rtol=1e-5), (
        float(jnp.max(jnp.abs(out - ref))))
    print("KERNEL_OK")
</pallas_src>

<mosaic_0001>
module attributes {stable_mosaic.version = 11 : i64} {
  func.func @kernel(%arg0: i32, %arg1: memref<98xf32, #tpu.memory_space<smem>>, %arg2: memref<1xf32, #tpu.memory_space<smem>>, %arg3: memref<2x4x256xf32, #tpu.memory_space<vmem>>, %arg4: memref<2x4x256xf32, #tpu.memory_space<vmem>>, %arg5: memref<2x358xf32, #tpu.memory_space<vmem>>, %arg6: memref<2x358xf32, #tpu.memory_space<vmem>>) attributes {dimension_semantics = [#tpu.dimension_semantics<parallel>], iteration_bounds = array<i64: 1>, scalar_prefetch = 0 : i64, scratch_operands = 2 : i64, tpu.core_type = #tpu.core_type<tc>, window_params = [{transform_indices = @transform_0, window_bounds = array<i64: 98>}, {transform_indices = @transform_1, window_bounds = array<i64: 1>}, {transform_indices = @transform_2, window_bounds = array<i64: 2, 4, 256>}, {transform_indices = @transform_3, window_bounds = array<i64: 2, 4, 256>}]} {
    %cst = arith.constant 0.000000e+00 : f32
    %0 = vector.broadcast %cst : f32 to vector<2x256xf32>
    %cst_0 = arith.constant 0xFF800000 : f32
    %1 = vector.broadcast %cst_0 : f32 to vector<2x256xf32>
    %c0_i32 = arith.constant 0 : i32
    %c4_i32 = arith.constant 4 : i32
    %2 = arith.muli %c0_i32, %c4_i32 : i32
    %3 = tpu.assume_multiple %2, 4 : i32
    %c0 = arith.constant 0 : index
    %4 = arith.index_cast %3 : i32 to index
    %c0_1 = arith.constant 0 : index
    %5 = vector.load %arg3[%c0, %4, %c0_1] : memref<2x4x256xf32, #tpu.memory_space<vmem>>, vector<2x4x256xf32>
    %cst_2 = arith.constant dense<0.000000e+00> : vector<2x256xf32>
    %6 = vector.multi_reduction <add>, %5, %cst_2 [1] : vector<2x4x256xf32> to vector<2x256xf32>
    %7 = arith.addf %0, %6 : vector<2x256xf32>
    %cst_3 = arith.constant dense<0xFF800000> : vector<2x256xf32>
    %8 = vector.multi_reduction <maximumf>, %5, %cst_3 [1] : vector<2x4x256xf32> to vector<2x256xf32>
    %9 = arith.maximumf %1, %8 : vector<2x256xf32>
    %c1_i32 = arith.constant 1 : i32
    %cst_4 = arith.constant 2.500000e-01 : f32
    %10 = vector.broadcast %cst_4 : f32 to vector<2x256xf32>
    %11 = arith.mulf %7, %10 : vector<2x256xf32>
    %cst_5 = arith.constant 0.000000e+00 : f32
    %12 = vector.broadcast %cst_5 : f32 to vector<2x358xf32>
    %c0_6 = arith.constant 0 : index
    %c0_7 = arith.constant 0 : index
    %13 = vector.load %arg5[%c0_6, %c0_7] : memref<2x358xf32, #tpu.memory_space<vmem>>, vector<2x358xf32>
    tpu.vector_store %arg5[%c0_6, %c0_7], %12 {strides = array<i32>} : memref<2x358xf32, #tpu.memory_space<vmem>>, vector<2x358xf32>,
    %cst_8 = arith.constant 0.000000e+00 : f32
    %14 = vector.broadcast %cst_8 : f32 to vector<2x358xf32>
    %c0_9 = arith.constant 0 : index
    %c0_10 = arith.constant 0 : index
    %15 = vector.load %arg6[%c0_9, %c0_10] : memref<2x358xf32, #tpu.memory_space<vmem>>, vector<2x358xf32>
    tpu.vector_store %arg6[%c0_9, %c0_10], %14 {strides = array<i32>} : memref<2x358xf32, #tpu.memory_space<vmem>>, vector<2x358xf32>,
    %c0_11 = arith.constant 0 : index
    %c51 = arith.constant 51 : index
    %16 = vector.load %arg5[%c0_11, %c51] : memref<2x358xf32, #tpu.memory_space<vmem>>, vector<2x256xf32>
    tpu.vector_store %arg5[%c0_11, %c51], %11 {strides = array<i32>} : memref<2x358xf32, #tpu.memory_space<vmem>>, vector<2x256xf32>,
    %c0_12 = arith.constant 0 : index
    %c51_13 = arith.constant 51 : index
    %17 = vector.load %arg6[%c0_12, %c51_13] : memref<2x358xf32, #tpu.memory_space<vmem>>, vector<2x256xf32>
    tpu.vector_store %arg6[%c0_12, %c51_13], %9 {strides = array<i32>} : memref<2x358xf32, #tpu.memory_space<vmem>>, vector<2x256xf32>,
    %18 = tpu.iota {dimensions = array<i32: 1>} : vector<1x256xi32>
    %c16_i32 = arith.constant 16 : i32
    %c0_i32_14 = arith.constant 0 : i32
    %19 = arith.cmpi eq, %c16_i32, %c0_i32_14 : i32
    %c1_i32_15 = arith.constant 1 : i32
    %20 = arith.select %19, %c1_i32_15, %c16_i32 : i32
    %21 = vector.broadcast %20 : i32 to vector<1x256xi32>
    %22 = arith.remsi %18, %21 : vector<1x256xi32>
    %c0_i32_16 = arith.constant 0 : i32
    %23 = vector.broadcast %c0_i32_16 : i32 to vector<1x256xi32>
    %24 = arith.cmpi ne, %22, %23 : vector<1x256xi32>
    %c0_i32_17 = arith.constant 0 : i32
    %25 = vector.broadcast %c0_i32_17 : i32 to vector<1x256xi32>
    %26 = arith.cmpi slt, %22, %25 : vector<1x256xi32>
    %c0_i32_18 = arith.constant 0 : i32
    %27 = arith.cmpi slt, %20, %c0_i32_18 : i32
    %28 = vector.broadcast %27 : i1 to vector<1x256xi1>
    %29 = vector.broadcast %28 : vector<1x256xi1> to vector<1x256xi1>
    %30 = arith.xori %26, %29 : vector<1x256xi1>
    %31 = arith.andi %30, %24 : vector<1x256xi1>
    %32 = vector.broadcast %20 : i32 to vector<1x256xi32>
    %33 = arith.addi %22, %32 : vector<1x256xi32>
    %34 = arith.select %31, %33, %22 : vector<1x256xi1>, vector<1x256xi32>
    %cst_19 = arith.constant 0.000000e+00 : f32
    %35 = vector.broadcast %cst_19 : f32 to vector<2x256xf32>
    %cst_20 = arith.constant 0.000000e+00 : f32
    %36 = vector.broadcast %cst_20 : f32 to vector<2x256xf32>
    %c0_21 = arith.constant 0 : index
    %c0_22 = arith.constant 0 : index
    %37 = vector.load %arg5[%c0_21, %c0_22] : memref<2x358xf32, #tpu.memory_space<vmem>>, vector<2x256xf32>
    %c0_23 = arith.constant 0 : index
    %c0_24 = arith.constant 0 : index
    %38 = vector.load %arg6[%c0_23, %c0_24] : memref<2x358xf32, #tpu.memory_space<vmem>>, vector<2x256xf32>
    %c0_25 = arith.constant 0 : index
    %39 = memref.load %arg1[%c0_25] : memref<98xf32, #tpu.memory_space<smem>>
    %40 = vector.broadcast %39 : f32 to vector<2x256xf32>
    %41 = arith.mulf %40, %37 : vector<2x256xf32>
    %42 = arith.addf %36, %41 : vector<2x256xf32>
    %c49 = arith.constant 49 : index
    %43 = memref.load %arg1[%c49] : memref<98xf32, #tpu.memory_space<smem>>
    %44 = vector.broadcast %43 : f32 to vector<2x256xf32>
    %45 = arith.mulf %44, %38 : vector<2x256xf32>
    %46 = arith.addf %42, %45 : vector<2x256xf32>
    %c0_26 = arith.constant 0 : index
    %c16 = arith.constant 16 : index
    %47 = vector.load %arg5[%c0_26, %c16] : memref<2x358xf32, #tpu.memory_space<vmem>>, vector<2x256xf32>
    %c0_27 = arith.constant 0 : index
    %c16_28 = arith.constant 16 : index
    %48 = vector.load %arg6[%c0_27, %c16_28] : memref<2x358xf32, #tpu.memory_space<vmem>>, vector<2x256xf32>
    %c7 = arith.constant 7 : index
    %49 = memref.load %arg1[%c7] : memref<98xf32, #tpu.memory_space<smem>>
    %50 = vector.broadcast %49 : f32 to vector<2x256xf32>
    %51 = arith.mulf %50, %47 : vector<2x256xf32>
    %52 = arith.addf %46, %51 : vector<2x256xf32>
    %c56 = arith.constant 56 : index
    %53 = memref.load %arg1[%c56] : memref<98xf32, #tpu.memory_space<smem>>
    %54 = vector.broadcast %53 : f32 to vector<2x256xf32>
    %55 = arith.mulf %54, %48 : vector<2x256xf32>
    %56 = arith.addf %52, %55 : vector<2x256xf32>
    %c0_29 = arith.constant 0 : index
    %c32 = arith.constant 32 : index
    %57 = vector.load %arg5[%c0_29, %c32] : memref<2x358xf32, #tpu.memory_space<vmem>>, vector<2x256xf32>
    %c0_30 = arith.constant 0 : index
    %c32_31 = arith.constant 32 : index
    %58 = vector.load %arg6[%c0_30, %c32_31] : memref<2x358xf32, #tpu.memory_space<vmem>>, vector<2x256xf32>
    %c14 = arith.constant 14 : index
    %59 = memref.load %arg1[%c14] : memref<98xf32, #tpu.memory_space<smem>>
    %60 = vector.broadcast %59 : f32 to vector<2x256xf32>
    %61 = arith.mulf %60, %57 : vector<2x256xf32>
    %62 = arith.addf %56, %61 : vector<2x256xf32>
    %c63 = arith.constant 63 : index
    %63 = memref.load %arg1[%c63] : memref<98xf32, #tpu.memory_space<smem>>
    %64 = vector.broadcast %63 : f32 to vector<2x256xf32>
    %65 = arith.mulf %64, %58 : vector<2x256xf32>
    %66 = arith.addf %62, %65 : vector<2x256xf32>
    %c0_32 = arith.constant 0 : index
    %c48 = arith.constant 48 : index
    %67 = vector.load %arg5[%c0_32, %c48] : memref<2x358xf32, #tpu.memory_space<vmem>>, vector<2x256xf32>
    %c0_33 = arith.constant 0 : index
    %c48_34 = arith.constant 48 : index
    %68 = vector.load %arg6[%c0_33, %c48_34] : memref<2x358xf32, #tpu.memory_space<vmem>>, vector<2x256xf32>
    %c21 = arith.constant 21 : index
    %69 = memref.load %arg1[%c21] : memref<98xf32, #tpu.memory_space<smem>>
    %70 = vector.broadcast %69 : f32 to vector<2x256xf32>
    %71 = arith.mulf %70, %67 : vector<2x256xf32>
    %72 = arith.addf %66, %71 : vector<2x256xf32>
    %c70 = arith.constant 70 : index
    %73 = memref.load %arg1[%c70] : memref<98xf32, #tpu.memory_space<smem>>
    %74 = vector.broadcast %73 : f32 to vector<2x256xf32>
    %75 = arith.mulf %74, %68 : vector<2x256xf32>
    %76 = arith.addf %72, %75 : vector<2x256xf32>
    %c0_35 = arith.constant 0 : index
    %c64 = arith.constant 64 : index
    %77 = vector.load %arg5[%c0_35, %c64] : memref<2x358xf32, #tpu.memory_space<vmem>>, vector<2x256xf32>
    %c0_36 = arith.constant 0 : index
    %c64_37 = arith.constant 64 : index
    %78 = vector.load %arg6[%c0_36, %c64_37] : memref<2x358xf32, #tpu.memory_space<vmem>>, vector<2x256xf32>
    %c28 = arith.constant 28 : index
    %79 = memref.load %arg1[%c28] : memref<98xf32, #tpu.memory_space<smem>>
    %80 = vector.broadcast %79 : f32 to vector<2x256xf32>
    %81 = arith.mulf %80, %77 : vector<2x256xf32>
    %82 = arith.addf %76, %81 : vector<2x256xf32>
    %c77 = arith.constant 77 : index
    %83 = memref.load %arg1[%c77] : memref<98xf32, #tpu.memory_space<smem>>
    %84 = vector.broadcast %83 : f32 to vector<2x256xf32>
    %85 = arith.mulf %84, %78 : vector<2x256xf32>
    %86 = arith.addf %82, %85 : vector<2x256xf32>
    %c0_38 = arith.constant 0 : index
    %c80 = arith.constant 80 : index
    %87 = vector.load %arg5[%c0_38, %c80] : memref<2x358xf32, #tpu.memory_space<vmem>>, vector<2x256xf32>
    %c0_39 = arith.constant 0 : index
    %c80_40 = arith.constant 80 : index
    %88 = vector.load %arg6[%c0_39, %c80_40] : memref<2x358xf32, #tpu.memory_space<vmem>>, vector<2x256xf32>
    %c35 = arith.constant 35 : index
    %89 = memref.load %arg1[%c35] : memref<98xf32, #tpu.memory_space<smem>>
    %90 = vector.broadcast %89 : f32 to vector<2x256xf32>
    %91 = arith.mulf %90, %87 : vector<2x256xf32>
    %92 = arith.addf %86, %91 : vector<2x256xf32>
    %c84 = arith.constant 84 : index
    %93 = memref.load %arg1[%c84] : memref<98xf32, #tpu.memory_space<smem>>
    %94 = vector.broadcast %93 : f32 to vector<2x256xf32>
    %95 = arith.mulf %94, %88 : vector<2x256xf32>
    %96 = arith.addf %92, %95 : vector<2x256xf32>
    %c0_41 = arith.constant 0 : index
    %c96 = arith.constant 96 : index
    %97 = vector.load %arg5[%c0_41, %c96] : memref<2x358xf32, #tpu.memory_space<vmem>>, vector<2x256xf32>
    %c0_42 = arith.constant 0 : index
    %c96_43 = arith.constant 96 : index
    %98 = vector.load %arg6[%c0_42, %c96_43] : memref<2x358xf32, #tpu.memory_space<vmem>>, vector<2x256xf32>
    %c42 = arith.constant 42 : index
    %99 = memref.load %arg1[%c42] : memref<98xf32, #tpu.memory_space<smem>>
    %100 = vector.broadcast %99 : f32 to vector<2x256xf32>
    %101 = arith.mulf %100, %97 : vector<2x256xf32>
    %102 = arith.addf %96, %101 : vector<2x256xf32>
    %c91 = arith.constant 91 : index
    %103 = memref.load %arg1[%c91] : memref<98xf32, #tpu.memory_space<smem>>
    %104 = vector.broadcast %103 : f32 to vector<2x256xf32>
    %105 = arith.mulf %104, %98 : vector<2x256xf32>
    %106 = arith.addf %102, %105 : vector<2x256xf32>
    %c3_i32 = arith.constant 3 : i32
    %107 = vector.broadcast %c3_i32 : i32 to vector<1x256xi32>
    %108 = arith.cmpi sge, %34, %107 : vector<1x256xi32>
    %c16_i32_44 = arith.constant 16 : i32
    %109 = vector.broadcast %c16_i32_44 : i32 to vector<1x256xi32>
    %110 = arith.cmpi slt, %34, %109 : vector<1x256xi32>
    %111 = arith.andi %108, %110 : vector<1x256xi1>
    %cst_45 = arith.constant 0.000000e+00 : f32
    %112 = vector.shape_cast %111 : vector<1x256xi1> to vector<1x256xi1>
    %113 = vector.broadcast %112 : vector<1x256xi1> to vector<2x256xi1>
    %114 = vector.broadcast %cst_45 : f32 to vector<2x256xf32>
    %115 = arith.select %113, %106, %114 : vector<2x256xi1>, vector<2x256xf32>
    %116 = arith.addf %35, %115 : vector<2x256xf32>
    %cst_46 = arith.constant 0.000000e+00 : f32
    %117 = vector.broadcast %cst_46 : f32 to vector<2x256xf32>
    %c0_47 = arith.constant 0 : index
    %c1 = arith.constant 1 : index
    %118 = vector.load %arg5[%c0_47, %c1] : memref<2x358xf32, #tpu.memory_space<vmem>>, vector<2x256xf32>
    %c0_48 = arith.constant 0 : index
    %c1_49 = arith.constant 1 : index
    %119 = vector.load %arg6[%c0_48, %c1_49] : memref<2x358xf32, #tpu.memory_space<vmem>>, vector<2x256xf32>
    %c1_50 = arith.constant 1 : index
    %120 = memref.load %arg1[%c1_50] : memref<98xf32, #tpu.memory_space<smem>>
    %121 = vector.broadcast %120 : f32 to vector<2x256xf32>
    %122 = arith.mulf %121, %118 : vector<2x256xf32>
    %123 = arith.addf %117, %122 : vector<2x256xf32>
    %c50 = arith.constant 50 : index
    %124 = memref.load %arg1[%c50] : memref<98xf32, #tpu.memory_space<smem>>
    %125 = vector.broadcast %124 : f32 to vector<2x256xf32>
    %126 = arith.mulf %125, %119 : vector<2x256xf32>
    %127 = arith.addf %123, %126 : vector<2x256xf32>
    %c0_51 = arith.constant 0 : index
    %c17 = arith.constant 17 : index
    %128 = vector.load %arg5[%c0_51, %c17] : memref<2x358xf32, #tpu.memory_space<vmem>>, vector<2x256xf32>
    %c0_52 = arith.constant 0 : index
    %c17_53 = arith.constant 17 : index
    %129 = vector.load %arg6[%c0_52, %c17_53] : memref<2x358xf32, #tpu.memory_space<vmem>>, vector<2x256xf32>
    %c8 = arith.constant 8 : index
    %130 = memref.load %arg1[%c8] : memref<98xf32, #tpu.memory_space<smem>>
    %131 = vector.broadcast %130 : f32 to vector<2x256xf32>
    %132 = arith.mulf %131, %128 : vector<2x256xf32>
    %133 = arith.addf %127, %132 : vector<2x256xf32>
    %c57 = arith.constant 57 : index
    %134 = memref.load %arg1[%c57] : memref<98xf32, #tpu.memory_space<smem>>
    %135 = vector.broadcast %134 : f32 to vector<2x256xf32>
    %136 = arith.mulf %135, %129 : vector<2x256xf32>
    %137 = arith.addf %133, %136 : vector<2x256xf32>
    %c0_54 = arith.constant 0 : index
    %c33 = arith.constant 33 : index
    %138 = vector.load %arg5[%c0_54, %c33] : memref<2x358xf32, #tpu.memory_space<vmem>>, vector<2x256xf32>
    %c0_55 = arith.constant 0 : index
    %c33_56 = arith.constant 33 : index
    %139 = vector.load %arg6[%c0_55, %c33_56] : memref<2x358xf32, #tpu.memory_space<vmem>>, vector<2x256xf32>
    %c15 = arith.constant 15 : index
    %140 = memref.load %arg1[%c15] : memref<98xf32, #tpu.memory_space<smem>>
    %141 = vector.broadcast %140 : f32 to vector<2x256xf32>
    %142 = arith.mulf %141, %138 : vector<2x256xf32>
    %143 = arith.addf %137, %142 : vector<2x256xf32>
    %c64_57 = arith.constant 64 : index
    %144 = memref.load %arg1[%c64_57] : memref<98xf32, #tpu.memory_space<smem>>
    %145 = vector.broadcast %144 : f32 to vector<2x256xf32>
    %146 = arith.mulf %145, %139 : vector<2x256xf32>
    %147 = arith.addf %143, %146 : vector<2x256xf32>
    %c0_58 = arith.constant 0 : index
    %c49_59 = arith.constant 49 : index
    %148 = vector.load %arg5[%c0_58, %c49_59] : memref<2x358xf32, #tpu.memory_space<vmem>>, vector<2x256xf32>
    %c0_60 = arith.constant 0 : index
    %c49_61 = arith.constant 49 : index
    %149 = vector.load %arg6[%c0_60, %c49_61] : memref<2x358xf32, #tpu.memory_space<vmem>>, vector<2x256xf32>
    %c22 = arith.constant 22 : index
    %150 = memref.load %arg1[%c22] : memref<98xf32, #tpu.memory_space<smem>>
    %151 = vector.broadcast %150 : f32 to vector<2x256xf32>
    %152 = arith.mulf %151, %148 : vector<2x256xf32>
    %153 = arith.addf %147, %152 : vector<2x256xf32>
    %c71 = arith.constant 71 : index
    %154 = memref.load %arg1[%c71] : memref<98xf32, #tpu.memory_space<smem>>
    %155 = vector.broadcast %154 : f32 to vector<2x256xf32>
    %156 = arith.mulf %155, %149 : vector<2x256xf32>
    %157 = arith.addf %153, %156 : vector<2x256xf32>
    %c0_62 = arith.constant 0 : index
    %c65 = arith.constant 65 : index
    %158 = vector.load %arg5[%c0_62, %c65] : memref<2x358xf32, #tpu.memory_space<vmem>>, vector<2x256xf32>
    %c0_63 = arith.constant 0 : index
    %c65_64 = arith.constant 65 : index
    %159 = vector.load %arg6[%c0_63, %c65_64] : memref<2x358xf32, #tpu.memory_space<vmem>>, vector<2x256xf32>
    %c29 = arith.constant 29 : index
    %160 = memref.load %arg1[%c29] : memref<98xf32, #tpu.memory_space<smem>>
    %161 = vector.broadcast %160 : f32 to vector<2x256xf32>
    %162 = arith.mulf %161, %158 : vector<2x256xf32>
    %163 = arith.addf %157, %162 : vector<2x256xf32>
    %c78 = arith.constant 78 : index
    %164 = memref.load %arg1[%c78] : memref<98xf32, #tpu.memory_space<smem>>
    %165 = vector.broadcast %164 : f32 to vector<2x256xf32>
    %166 = arith.mulf %165, %159 : vector<2x256xf32>
    %167 = arith.addf %163, %166 : vector<2x256xf32>
    %c0_65 = arith.constant 0 : index
    %c81 = arith.constant 81 : index
    %168 = vector.load %arg5[%c0_65, %c81] : memref<2x358xf32, #tpu.memory_space<vmem>>, vector<2x256xf32>
    %c0_66 = arith.constant 0 : index
    %c81_67 = arith.constant 81 : index
    %169 = vector.load %arg6[%c0_66, %c81_67] : memref<2x358xf32, #tpu.memory_space<vmem>>, vector<2x256xf32>
    %c36 = arith.constant 36 : index
    %170 = memref.load %arg1[%c36] : memref<98xf32, #tpu.memory_space<smem>>
    %171 = vector.broadcast %170 : f32 to vector<2x256xf32>
    %172 = arith.mulf %171, %168 : vector<2x256xf32>
    %173 = arith.addf %167, %172 : vector<2x256xf32>
    %c85 = arith.constant 85 : index
    %174 = memref.load %arg1[%c85] : memref<98xf32, #tpu.memory_space<smem>>
    %175 = vector.broadcast %174 : f32 to vector<2x256xf32>
    %176 = arith.mulf %175, %169 : vector<2x256xf32>
    %177 = arith.addf %173, %176 : vector<2x256xf32>
    %c0_68 = arith.constant 0 : index
    %c97 = arith.constant 97 : index
    %178 = vector.load %arg5[%c0_68, %c97] : memref<2x358xf32, #tpu.memory_space<vmem>>, vector<2x256xf32>
    %c0_69 = arith.constant 0 : index
    %c97_70 = arith.constant 97 : index
    %179 = vector.load %arg6[%c0_69, %c97_70] : memref<2x358xf32, #tpu.memory_space<vmem>>, vector<2x256xf32>
    %c43 = arith.constant 43 : index
    %180 = memref.load %arg1[%c43] : memref<98xf32, #tpu.memory_space<smem>>
    %181 = vector.broadcast %180 : f32 to vector<2x256xf32>
    %182 = arith.mulf %181, %178 : vector<2x256xf32>
    %183 = arith.addf %177, %182 : vector<2x256xf32>
    %c92 = arith.constant 92 : index
    %184 = memref.load %arg1[%c92] : memref<98xf32, #tpu.memory_space<smem>>
    %185 = vector.broadcast %184 : f32 to vector<2x256xf32>
    %186 = arith.mulf %185, %179 : vector<2x256xf32>
    %187 = arith.addf %183, %186 : vector<2x256xf32>
    %c2_i32 = arith.constant 2 : i32
    %188 = vector.broadcast %c2_i32 : i32 to vector<1x256xi32>
    %189 = arith.cmpi sge, %34, %188 : vector<1x256xi32>
    %c16_i32_71 = arith.constant 16 : i32
    %190 = vector.broadcast %c16_i32_71 : i32 to vector<1x256xi32>
    %191 = arith.cmpi slt, %34, %190 : vector<1x256xi32>
    %192 = arith.andi %189, %191 : vector<1x256xi1>
    %cst_72 = arith.constant 0.000000e+00 : f32
    %193 = vector.shape_cast %192 : vector<1x256xi1> to vector<1x256xi1>
    %194 = vector.broadcast %193 : vector<1x256xi1> to vector<2x256xi1>
    %195 = vector.broadcast %cst_72 : f32 to vector<2x256xf32>
    %196 = arith.select %194, %187, %195 : vector<2x256xi1>, vector<2x256xf32>
    %197 = arith.addf %116, %196 : vector<2x256xf32>
    %cst_73 = arith.constant 0.000000e+00 : f32
    %198 = vector.broadcast %cst_73 : f32 to vector<2x256xf32>
    %c0_74 = arith.constant 0 : index
    %c2 = arith.constant 2 : index
    %199 = vector.load %arg5[%c0_74, %c2] : memref<2x358xf32, #tpu.memory_space<vmem>>, vector<2x256xf32>
    %c0_75 = arith.constant 0 : index
    %c2_76 = arith.constant 2 : index
    %200 = vector.load %arg6[%c0_75, %c2_76] : memref<2x358xf32, #tpu.memory_space<vmem>>, vector<2x256xf32>
    %c2_77 = arith.constant 2 : index
    %201 = memref.load %arg1[%c2_77] : memref<98xf32, #tpu.memory_space<smem>>
    %202 = vector.broadcast %201 : f32 to vector<2x256xf32>
    %203 = arith.mulf %202, %199 : vector<2x256xf32>
    %204 = arith.addf %198, %203 : vector<2x256xf32>
    %c51_78 = arith.constant 51 : index
    %205 = memref.load %arg1[%c51_78] : memref<98xf32, #tpu.memory_space<smem>>
    %206 = vector.broadcast %205 : f32 to vector<2x256xf32>
    %207 = arith.mulf %206, %200 : vector<2x256xf32>
    %208 = arith.addf %204, %207 : vector<2x256xf32>
    %c0_79 = arith.constant 0 : index
    %c18 = arith.constant 18 : index
    %209 = vector.load %arg5[%c0_79, %c18] : memref<2x358xf32, #tpu.memory_space<vmem>>, vector<2x256xf32>
    %c0_80 = arith.constant 0 : index
    %c18_81 = arith.constant 18 : index
    %210 = vector.load %arg6[%c0_80, %c18_81] : memref<2x358xf32, #tpu.memory_space<vmem>>, vector<2x256xf32>
    %c9 = arith.constant 9 : index
    %211 = memref.load %arg1[%c9] : memref<98xf32, #tpu.memory_space<smem>>
    %212 = vector.broadcast %211 : f32 to vector<2x256xf32>
    %213 = arith.mulf %212, %209 : vector<2x256xf32>
    %214 = arith.addf %208, %213 : vector<2x256xf32>
    %c58 = arith.constant 58 : index
    %215 = memref.load %arg1[%c58] : memref<98xf32, #tpu.memory_space<smem>>
    %216 = vector.broadcast %215 : f32 to vector<2x256xf32>
    %217 = arith.mulf %216, %210 : vector<2x256xf32>
    %218 = arith.addf %214, %217 : vector<2x256xf32>
    %c0_82 = arith.constant 0 : index
    %c34 = arith.constant 34 : index
    %219 = vector.load %arg5[%c0_82, %c34] : memref<2x358xf32, #tpu.memory_space<vmem>>, vector<2x256xf32>
    %c0_83 = arith.constant 0 : index
    %c34_84 = arith.constant 34 : index
    %220 = vector.load %arg6[%c0_83, %c34_84] : memref<2x358xf32, #tpu.memory_space<vmem>>, vector<2x256xf32>
    %c16_85 = arith.constant 16 : index
    %221 = memref.load %arg1[%c16_85] : memref<98xf32, #tpu.memory_space<smem>>
    %222 = vector.broadcast %221 : f32 to vector<2x256xf32>
    %223 = arith.mulf %222, %219 : vector<2x256xf32>
    %224 = arith.addf %218, %223 : vector<2x256xf32>
    %c65_86 = arith.constant 65 : index
    %225 = memref.load %arg1[%c65_86] : memref<98xf32, #tpu.memory_space<smem>>
    %226 = vector.broadcast %225 : f32 to vector<2x256xf32>
    %227 = arith.mulf %226, %220 : vector<2x256xf32>
    %228 = arith.addf %224, %227 : vector<2x256xf32>
    %c0_87 = arith.constant 0 : index
    %c50_88 = arith.constant 50 : index
    %229 = vector.load %arg5[%c0_87, %c50_88] : memref<2x358xf32, #tpu.memory_space<vmem>>, vector<2x256xf32>
    %c0_89 = arith.constant 0 : index
    %c50_90 = arith.constant 50 : index
    %230 = vector.load %arg6[%c0_89, %c50_90] : memref<2x358xf32, #tpu.memory_space<vmem>>, vector<2x256xf32>
    %c23 = arith.constant 23 : index
    %231 = memref.load %arg1[%c23] : memref<98xf32, #tpu.memory_space<smem>>
    %232 = vector.broadcast %231 : f32 to vector<2x256xf32>
    %233 = arith.mulf %232, %229 : vector<2x256xf32>
    %234 = arith.addf %228, %233 : vector<2x256xf32>
    %c72 = arith.constant 72 : index
    %235 = memref.load %arg1[%c72] : memref<98xf32, #tpu.memory_space<smem>>
    %236 = vector.broadcast %235 : f32 to vector<2x256xf32>
    %237 = arith.mulf %236, %230 : vector<2x256xf32>
    %238 = arith.addf %234, %237 : vector<2x256xf32>
    %c0_91 = arith.constant 0 : index
    %c66 = arith.constant 66 : index
    %239 = vector.load %arg5[%c0_91, %c66] : memref<2x358xf32, #tpu.memory_space<vmem>>, vector<2x256xf32>
    %c0_92 = arith.constant 0 : index
    %c66_93 = arith.constant 66 : index
    %240 = vector.load %arg6[%c0_92, %c66_93] : memref<2x358xf32, #tpu.memory_space<vmem>>, vector<2x256xf32>
    %c30 = arith.constant 30 : index
    %241 = memref.load %arg1[%c30] : memref<98xf32, #tpu.memory_space<smem>>
    %242 = vector.broadcast %241 : f32 to vector<2x256xf32>
    %243 = arith.mulf %242, %239 : vector<2x256xf32>
    %244 = arith.addf %238, %243 : vector<2x256xf32>
    %c79 = arith.constant 79 : index
    %245 = memref.load %arg1[%c79] : memref<98xf32, #tpu.memory_space<smem>>
    %246 = vector.broadcast %245 : f32 to vector<2x256xf32>
    %247 = arith.mulf %246, %240 : vector<2x256xf32>
    %248 = arith.addf %244, %247 : vector<2x256xf32>
    %c0_94 = arith.constant 0 : index
    %c82 = arith.constant 82 : index
    %249 = vector.load %arg5[%c0_94, %c82] : memref<2x358xf32, #tpu.memory_space<vmem>>, vector<2x256xf32>
    %c0_95 = arith.constant 0 : index
    %c82_96 = arith.constant 82 : index
    %250 = vector.load %arg6[%c0_95, %c82_96] : memref<2x358xf32, #tpu.memory_space<vmem>>, vector<2x256xf32>
    %c37 = arith.constant 37 : index
    %251 = memref.load %arg1[%c37] : memref<98xf32, #tpu.memory_space<smem>>
    %252 = vector.broadcast %251 : f32 to vector<2x256xf32>
    %253 = arith.mulf %252, %249 : vector<2x256xf32>
    %254 = arith.addf %248, %253 : vector<2x256xf32>
    %c86 = arith.constant 86 : index
    %255 = memref.load %arg1[%c86] : memref<98xf32, #tpu.memory_space<smem>>
    %256 = vector.broadcast %255 : f32 to vector<2x256xf32>
    %257 = arith.mulf %256, %250 : vector<2x256xf32>
    %258 = arith.addf %254, %257 : vector<2x256xf32>
    %c0_97 = arith.constant 0 : index
    %c98 = arith.constant 98 : index
    %259 = vector.load %arg5[%c0_97, %c98] : memref<2x358xf32, #tpu.memory_space<vmem>>, vector<2x256xf32>
    %c0_98 = arith.constant 0 : index
    %c98_99 = arith.constant 98 : index
    %260 = vector.load %arg6[%c0_98, %c98_99] : memref<2x358xf32, #tpu.memory_space<vmem>>, vector<2x256xf32>
    %c44 = arith.constant 44 : index
    %261 = memref.load %arg1[%c44] : memref<98xf32, #tpu.memory_space<smem>>
    %262 = vector.broadcast %261 : f32 to vector<2x256xf32>
    %263 = arith.mulf %262, %259 : vector<2x256xf32>
    %264 = arith.addf %258, %263 : vector<2x256xf32>
    %c93 = arith.constant 93 : index
    %265 = memref.load %arg1[%c93] : memref<98xf32, #tpu.memory_space<smem>>
    %266 = vector.broadcast %265 : f32 to vector<2x256xf32>
    %267 = arith.mulf %266, %260 : vector<2x256xf32>
    %268 = arith.addf %264, %267 : vector<2x256xf32>
    %c1_i32_100 = arith.constant 1 : i32
    %269 = vector.broadcast %c1_i32_100 : i32 to vector<1x256xi32>
    %270 = arith.cmpi sge, %34, %269 : vector<1x256xi32>
    %c16_i32_101 = arith.constant 16 : i32
    %271 = vector.broadcast %c16_i32_101 : i32 to vector<1x256xi32>
    %272 = arith.cmpi slt, %34, %271 : vector<1x256xi32>
    %273 = arith.andi %270, %272 : vector<1x256xi1>
    %cst_102 = arith.constant 0.000000e+00 : f32
    %274 = vector.shape_cast %273 : vector<1x256xi1> to vector<1x256xi1>
    %275 = vector.broadcast %274 : vector<1x256xi1> to vector<2x256xi1>
    %276 = vector.broadcast %cst_102 : f32 to vector<2x256xf32>
    %277 = arith.select %275, %268, %276 : vector<2x256xi1>, vector<2x256xf32>
    %278 = arith.addf %197, %277 : vector<2x256xf32>
    %cst_103 = arith.constant 0.000000e+00 : f32
    %279 = vector.broadcast %cst_103 : f32 to vector<2x256xf32>
    %c0_104 = arith.constant 0 : index
    %c3 = arith.constant 3 : index
    %280 = vector.load %arg5[%c0_104, %c3] : memref<2x358xf32, #tpu.memory_space<vmem>>, vector<2x256xf32>
    %c0_105 = arith.constant 0 : index
    %c3_106 = arith.constant 3 : index
    %281 = vector.load %arg6[%c0_105, %c3_106] : memref<2x358xf32, #tpu.memory_space<vmem>>, vector<2x256xf32>
    %c3_107 = arith.constant 3 : index
    %282 = memref.load %arg1[%c3_107] : memref<98xf32, #tpu.memory_space<smem>>
    %283 = vector.broadcast %282 : f32 to vector<2x256xf32>
    %284 = arith.mulf %283, %280 : vector<2x256xf32>
    %285 = arith.addf %279, %284 : vector<2x256xf32>
    %c52 = arith.constant 52 : index
    %286 = memref.load %arg1[%c52] : memref<98xf32, #tpu.memory_space<smem>>
    %287 = vector.broadcast %286 : f32 to vector<2x256xf32>
    %288 = arith.mulf %287, %281 : vector<2x256xf32>
    %289 = arith.addf %285, %288 : vector<2x256xf32>
    %c0_108 = arith.constant 0 : index
    %c19 = arith.constant 19 : index
    %290 = vector.load %arg5[%c0_108, %c19] : memref<2x358xf32, #tpu.memory_space<vmem>>, vector<2x256xf32>
    %c0_109 = arith.constant 0 : index
    %c19_110 = arith.constant 19 : index
    %291 = vector.load %arg6[%c0_109, %c19_110] : memref<2x358xf32, #tpu.memory_space<vmem>>, vector<2x256xf32>
    %c10 = arith.constant 10 : index
    %292 = memref.load %arg1[%c10] : memref<98xf32, #tpu.memory_space<smem>>
    %293 = vector.broadcast %292 : f32 to vector<2x256xf32>
    %294 = arith.mulf %293, %290 : vector<2x256xf32>
    %295 = arith.addf %289, %294 : vector<2x256xf32>
    %c59 = arith.constant 59 : index
    %296 = memref.load %arg1[%c59] : memref<98xf32, #tpu.memory_space<smem>>
    %297 = vector.broadcast %296 : f32 to vector<2x256xf32>
    %298 = arith.mulf %297, %291 : vector<2x256xf32>
    %299 = arith.addf %295, %298 : vector<2x256xf32>
    %c0_111 = arith.constant 0 : index
    %c35_112 = arith.constant 35 : index
    %300 = vector.load %arg5[%c0_111, %c35_112] : memref<2x358xf32, #tpu.memory_space<vmem>>, vector<2x256xf32>
    %c0_113 = arith.constant 0 : index
    %c35_114 = arith.constant 35 : index
    %301 = vector.load %arg6[%c0_113, %c35_114] : memref<2x358xf32, #tpu.memory_space<vmem>>, vector<2x256xf32>
    %c17_115 = arith.constant 17 : index
    %302 = memref.load %arg1[%c17_115] : memref<98xf32, #tpu.memory_space<smem>>
    %303 = vector.broadcast %302 : f32 to vector<2x256xf32>
    %304 = arith.mulf %303, %300 : vector<2x256xf32>
    %305 = arith.addf %299, %304 : vector<2x256xf32>
    %c66_116 = arith.constant 66 : index
    %306 = memref.load %arg1[%c66_116] : memref<98xf32, #tpu.memory_space<smem>>
    %307 = vector.broadcast %306 : f32 to vector<2x256xf32>
    %308 = arith.mulf %307, %301 : vector<2x256xf32>
    %309 = arith.addf %305, %308 : vector<2x256xf32>
    %c0_117 = arith.constant 0 : index
    %c51_118 = arith.constant 51 : index
    %310 = vector.load %arg5[%c0_117, %c51_118] : memref<2x358xf32, #tpu.memory_space<vmem>>, vector<2x256xf32>
    %c0_119 = arith.constant 0 : index
    %c51_120 = arith.constant 51 : index
    %311 = vector.load %arg6[%c0_119, %c51_120] : memref<2x358xf32, #tpu.memory_space<vmem>>, vector<2x256xf32>
    %c24 = arith.constant 24 : index
    %312 = memref.load %arg1[%c24] : memref<98xf32, #tpu.memory_space<smem>>
    %313 = vector.broadcast %312 : f32 to vector<2x256xf32>
    %314 = arith.mulf %313, %310 : vector<2x256xf32>
    %315 = arith.addf %309, %314 : vector<2x256xf32>
    %c73 = arith.constant 73 : index
    %316 = memref.load %arg1[%c73] : memref<98xf32, #tpu.memory_space<smem>>
    %317 = vector.broadcast %316 : f32 to vector<2x256xf32>
    %318 = arith.mulf %317, %311 : vector<2x256xf32>
    %319 = arith.addf %315, %318 : vector<2x256xf32>
    %c0_121 = arith.constant 0 : index
    %c67 = arith.constant 67 : index
    %320 = vector.load %arg5[%c0_121, %c67] : memref<2x358xf32, #tpu.memory_space<vmem>>, vector<2x256xf32>
    %c0_122 = arith.constant 0 : index
    %c67_123 = arith.constant 67 : index
    %321 = vector.load %arg6[%c0_122, %c67_123] : memref<2x358xf32, #tpu.memory_space<vmem>>, vector<2x256xf32>
    %c31 = arith.constant 31 : index
    %322 = memref.load %arg1[%c31] : memref<98xf32, #tpu.memory_space<smem>>
    %323 = vector.broadcast %322 : f32 to vector<2x256xf32>
    %324 = arith.mulf %323, %320 : vector<2x256xf32>
    %325 = arith.addf %319, %324 : vector<2x256xf32>
    %c80_124 = arith.constant 80 : index
    %326 = memref.load %arg1[%c80_124] : memref<98xf32, #tpu.memory_space<smem>>
    %327 = vector.broadcast %326 : f32 to vector<2x256xf32>
    %328 = arith.mulf %327, %321 : vector<2x256xf32>
    %329 = arith.addf %325, %328 : vector<2x256xf32>
    %c0_125 = arith.constant 0 : index
    %c83 = arith.constant 83 : index
    %330 = vector.load %arg5[%c0_125, %c83] : memref<2x358xf32, #tpu.memory_space<vmem>>, vector<2x256xf32>
    %c0_126 = arith.constant 0 : index
    %c83_127 = arith.constant 83 : index
    %331 = vector.load %arg6[%c0_126, %c83_127] : memref<2x358xf32, #tpu.memory_space<vmem>>, vector<2x256xf32>
    %c38 = arith.constant 38 : index
    %332 = memref.load %arg1[%c38] : memref<98xf32, #tpu.memory_space<smem>>
    %333 = vector.broadcast %332 : f32 to vector<2x256xf32>
    %334 = arith.mulf %333, %330 : vector<2x256xf32>
    %335 = arith.addf %329, %334 : vector<2x256xf32>
    %c87 = arith.constant 87 : index
    %336 = memref.load %arg1[%c87] : memref<98xf32, #tpu.memory_space<smem>>
    %337 = vector.broadcast %336 : f32 to vector<2x256xf32>
    %338 = arith.mulf %337, %331 : vector<2x256xf32>
    %339 = arith.addf %335, %338 : vector<2x256xf32>
    %c0_128 = arith.constant 0 : index
    %c99 = arith.constant 99 : index
    %340 = vector.load %arg5[%c0_128, %c99] : memref<2x358xf32, #tpu.memory_space<vmem>>, vector<2x256xf32>
    %c0_129 = arith.constant 0 : index
    %c99_130 = arith.constant 99 : index
    %341 = vector.load %arg6[%c0_129, %c99_130] : memref<2x358xf32, #tpu.memory_space<vmem>>, vector<2x256xf32>
    %c45 = arith.constant 45 : index
    %342 = memref.load %arg1[%c45] : memref<98xf32, #tpu.memory_space<smem>>
    %343 = vector.broadcast %342 : f32 to vector<2x256xf32>
    %344 = arith.mulf %343, %340 : vector<2x256xf32>
    %345 = arith.addf %339, %344 : vector<2x256xf32>
    %c94 = arith.constant 94 : index
    %346 = memref.load %arg1[%c94] : memref<98xf32, #tpu.memory_space<smem>>
    %347 = vector.broadcast %346 : f32 to vector<2x256xf32>
    %348 = arith.mulf %347, %341 : vector<2x256xf32>
    %349 = arith.addf %345, %348 : vector<2x256xf32>
    %350 = arith.addf %278, %349 : vector<2x256xf32>
    %cst_131 = arith.constant 0.000000e+00 : f32
    %351 = vector.broadcast %cst_131 : f32 to vector<2x256xf32>
    %c0_132 = arith.constant 0 : index
    %c4 = arith.constant 4 : index
    %352 = vector.load %arg5[%c0_132, %c4] : memref<2x358xf32, #tpu.memory_space<vmem>>, vector<2x256xf32>
    %c0_133 = arith.constant 0 : index
    %c4_134 = arith.constant 4 : index
    %353 = vector.load %arg6[%c0_133, %c4_134] : memref<2x358xf32, #tpu.memory_space<vmem>>, vector<2x256xf32>
    %c4_135 = arith.constant 4 : index
    %354 = memref.load %arg1[%c4_135] : memref<98xf32, #tpu.memory_space<smem>>
    %355 = vector.broadcast %354 : f32 to vector<2x256xf32>
    %356 = arith.mulf %355, %352 : vector<2x256xf32>
    %357 = arith.addf %351, %356 : vector<2x256xf32>
    %c53 = arith.constant 53 : index
    %358 = memref.load %arg1[%c53] : memref<98xf32, #tpu.memory_space<smem>>
    %359 = vector.broadcast %358 : f32 to vector<2x256xf32>
    %360 = arith.mulf %359, %353 : vector<2x256xf32>
    %361 = arith.addf %357, %360 : vector<2x256xf32>
    %c0_136 = arith.constant 0 : index
    %c20 = arith.constant 20 : index
    %362 = vector.load %arg5[%c0_136, %c20] : memref<2x358xf32, #tpu.memory_space<vmem>>, vector<2x256xf32>
    %c0_137 = arith.constant 0 : index
    %c20_138 = arith.constant 20 : index
    %363 = vector.load %arg6[%c0_137, %c20_138] : memref<2x358xf32, #tpu.memory_space<vmem>>, vector<2x256xf32>
    %c11 = arith.constant 11 : index
    %364 = memref.load %arg1[%c11] : memref<98xf32, #tpu.memory_space<smem>>
    %365 = vector.broadcast %364 : f32 to vector<2x256xf32>
    %366 = arith.mulf %365, %362 : vector<2x256xf32>
    %367 = arith.addf %361, %366 : vector<2x256xf32>
    %c60 = arith.constant 60 : index
    %368 = memref.load %arg1[%c60] : memref<98xf32, #tpu.memory_space<smem>>
    %369 = vector.broadcast %368 : f32 to vector<2x256xf32>
    %370 = arith.mulf %369, %363 : vector<2x256xf32>
    %371 = arith.addf %367, %370 : vector<2x256xf32>
    %c0_139 = arith.constant 0 : index
    %c36_140 = arith.constant 36 : index
    %372 = vector.load %arg5[%c0_139, %c36_140] : memref<2x358xf32, #tpu.memory_space<vmem>>, vector<2x256xf32>
    %c0_141 = arith.constant 0 : index
    %c36_142 = arith.constant 36 : index
    %373 = vector.load %arg6[%c0_141, %c36_142] : memref<2x358xf32, #tpu.memory_space<vmem>>, vector<2x256xf32>
    %c18_143 = arith.constant 18 : index
    %374 = memref.load %arg1[%c18_143] : memref<98xf32, #tpu.memory_space<smem>>
    %375 = vector.broadcast %374 : f32 to vector<2x256xf32>
    %376 = arith.mulf %375, %372 : vector<2x256xf32>
    %377 = arith.addf %371, %376 : vector<2x256xf32>
    %c67_144 = arith.constant 67 : index
    %378 = memref.load %arg1[%c67_144] : memref<98xf32, #tpu.memory_space<smem>>
    %379 = vector.broadcast %378 : f32 to vector<2x256xf32>
    %380 = arith.mulf %379, %373 : vector<2x256xf32>
    %381 = arith.addf %377, %380 : vector<2x256xf32>
    %c0_145 = arith.constant 0 : index
    %c52_146 = arith.constant 52 : index
    %382 = vector.load %arg5[%c0_145, %c52_146] : memref<2x358xf32, #tpu.memory_space<vmem>>, vector<2x256xf32>
    %c0_147 = arith.constant 0 : index
    %c52_148 = arith.constant 52 : index
    %383 = vector.load %arg6[%c0_147, %c52_148] : memref<2x358xf32, #tpu.memory_space<vmem>>, vector<2x256xf32>
    %c25 = arith.constant 25 : index
    %384 = memref.load %arg1[%c25] : memref<98xf32, #tpu.memory_space<smem>>
    %385 = vector.broadcast %384 : f32 to vector<2x256xf32>
    %386 = arith.mulf %385, %382 : vector<2x256xf32>
    %387 = arith.addf %381, %386 : vector<2x256xf32>
    %c74 = arith.constant 74 : index
    %388 = memref.load %arg1[%c74] : memref<98xf32, #tpu.memory_space<smem>>
    %389 = vector.broadcast %388 : f32 to vector<2x256xf32>
    %390 = arith.mulf %389, %383 : vector<2x256xf32>
    %391 = arith.addf %387, %390 : vector<2x256xf32>
    %c0_149 = arith.constant 0 : index
    %c68 = arith.constant 68 : index
    %392 = vector.load %arg5[%c0_149, %c68] : memref<2x358xf32, #tpu.memory_space<vmem>>, vector<2x256xf32>
    %c0_150 = arith.constant 0 : index
    %c68_151 = arith.constant 68 : index
    %393 = vector.load %arg6[%c0_150, %c68_151] : memref<2x358xf32, #tpu.memory_space<vmem>>, vector<2x256xf32>
    %c32_152 = arith.constant 32 : index
    %394 = memref.load %arg1[%c32_152] : memref<98xf32, #tpu.memory_space<smem>>
    %395 = vector.broadcast %394 : f32 to vector<2x256xf32>
    %396 = arith.mulf %395, %392 : vector<2x256xf32>
    %397 = arith.addf %391, %396 : vector<2x256xf32>
    %c81_153 = arith.constant 81 : index
    %398 = memref.load %arg1[%c81_153] : memref<98xf32, #tpu.memory_space<smem>>
    %399 = vector.broadcast %398 : f32 to vector<2x256xf32>
    %400 = arith.mulf %399, %393 : vector<2x256xf32>
    %401 = arith.addf %397, %400 : vector<2x256xf32>
    %c0_154 = arith.constant 0 : index
    %c84_155 = arith.constant 84 : index
    %402 = vector.load %arg5[%c0_154, %c84_155] : memref<2x358xf32, #tpu.memory_space<vmem>>, vector<2x256xf32>
    %c0_156 = arith.constant 0 : index
    %c84_157 = arith.constant 84 : index
    %403 = vector.load %arg6[%c0_156, %c84_157] : memref<2x358xf32, #tpu.memory_space<vmem>>, vector<2x256xf32>
    %c39 = arith.constant 39 : index
    %404 = memref.load %arg1[%c39] : memref<98xf32, #tpu.memory_space<smem>>
    %405 = vector.broadcast %404 : f32 to vector<2x256xf32>
    %406 = arith.mulf %405, %402 : vector<2x256xf32>
    %407 = arith.addf %401, %406 : vector<2x256xf32>
    %c88 = arith.constant 88 : index
    %408 = memref.load %arg1[%c88] : memref<98xf32, #tpu.memory_space<smem>>
    %409 = vector.broadcast %408 : f32 to vector<2x256xf32>
    %410 = arith.mulf %409, %403 : vector<2x256xf32>
    %411 = arith.addf %407, %410 : vector<2x256xf32>
    %c0_158 = arith.constant 0 : index
    %c100 = arith.constant 100 : index
    %412 = vector.load %arg5[%c0_158, %c100] : memref<2x358xf32, #tpu.memory_space<vmem>>, vector<2x256xf32>
    %c0_159 = arith.constant 0 : index
    %c100_160 = arith.constant 100 : index
    %413 = vector.load %arg6[%c0_159, %c100_160] : memref<2x358xf32, #tpu.memory_space<vmem>>, vector<2x256xf32>
    %c46 = arith.constant 46 : index
    %414 = memref.load %arg1[%c46] : memref<98xf32, #tpu.memory_space<smem>>
    %415 = vector.broadcast %414 : f32 to vector<2x256xf32>
    %416 = arith.mulf %415, %412 : vector<2x256xf32>
    %417 = arith.addf %411, %416 : vector<2x256xf32>
    %c95 = arith.constant 95 : index
    %418 = memref.load %arg1[%c95] : memref<98xf32, #tpu.memory_space<smem>>
    %419 = vector.broadcast %418 : f32 to vector<2x256xf32>
    %420 = arith.mulf %419, %413 : vector<2x256xf32>
    %421 = arith.addf %417, %420 : vector<2x256xf32>
    %c0_i32_161 = arith.constant 0 : i32
    %422 = vector.broadcast %c0_i32_161 : i32 to vector<1x256xi32>
    %423 = arith.cmpi sge, %34, %422 : vector<1x256xi32>
    %c15_i32 = arith.constant 15 : i32
    %424 = vector.broadcast %c15_i32 : i32 to vector<1x256xi32>
    %425 = arith.cmpi slt, %34, %424 : vector<1x256xi32>
    %426 = arith.andi %423, %425 : vector<1x256xi1>
    %cst_162 = arith.constant 0.000000e+00 : f32
    %427 = vector.shape_cast %426 : vector<1x256xi1> to vector<1x256xi1>
    %428 = vector.broadcast %427 : vector<1x256xi1> to vector<2x256xi1>
    %429 = vector.broadcast %cst_162 : f32 to vector<2x256xf32>
    %430 = arith.select %428, %421, %429 : vector<2x256xi1>, vector<2x256xf32>
    %431 = arith.addf %350, %430 : vector<2x256xf32>
    %cst_163 = arith.constant 0.000000e+00 : f32
    %432 = vector.broadcast %cst_163 : f32 to vector<2x256xf32>
    %c0_164 = arith.constant 0 : index
    %c5 = arith.constant 5 : index
    %433 = vector.load %arg5[%c0_164, %c5] : memref<2x358xf32, #tpu.memory_space<vmem>>, vector<2x256xf32>
    %c0_165 = arith.constant 0 : index
    %c5_166 = arith.constant 5 : index
    %434 = vector.load %arg6[%c0_165, %c5_166] : memref<2x358xf32, #tpu.memory_space<vmem>>, vector<2x256xf32>
    %c5_167 = arith.constant 5 : index
    %435 = memref.load %arg1[%c5_167] : memref<98xf32, #tpu.memory_space<smem>>
    %436 = vector.broadcast %435 : f32 to vector<2x256xf32>
    %437 = arith.mulf %436, %433 : vector<2x256xf32>
    %438 = arith.addf %432, %437 : vector<2x256xf32>
    %c54 = arith.constant 54 : index
    %439 = memref.load %arg1[%c54] : memref<98xf32, #tpu.memory_space<smem>>
    %440 = vector.broadcast %439 : f32 to vector<2x256xf32>
    %441 = arith.mulf %440, %434 : vector<2x256xf32>
    %442 = arith.addf %438, %441 : vector<2x256xf32>
    %c0_168 = arith.constant 0 : index
    %c21_169 = arith.constant 21 : index
    %443 = vector.load %arg5[%c0_168, %c21_169] : memref<2x358xf32, #tpu.memory_space<vmem>>, vector<2x256xf32>
    %c0_170 = arith.constant 0 : index
    %c21_171 = arith.constant 21 : index
    %444 = vector.load %arg6[%c0_170, %c21_171] : memref<2x358xf32, #tpu.memory_space<vmem>>, vector<2x256xf32>
    %c12 = arith.constant 12 : index
    %445 = memref.load %arg1[%c12] : memref<98xf32, #tpu.memory_space<smem>>
    %446 = vector.broadcast %445 : f32 to vector<2x256xf32>
    %447 = arith.mulf %446, %443 : vector<2x256xf32>
    %448 = arith.addf %442, %447 : vector<2x256xf32>
    %c61 = arith.constant 61 : index
    %449 = memref.load %arg1[%c61] : memref<98xf32, #tpu.memory_space<smem>>
    %450 = vector.broadcast %449 : f32 to vector<2x256xf32>
    %451 = arith.mulf %450, %444 : vector<2x256xf32>
    %452 = arith.addf %448, %451 : vector<2x256xf32>
    %c0_172 = arith.constant 0 : index
    %c37_173 = arith.constant 37 : index
    %453 = vector.load %arg5[%c0_172, %c37_173] : memref<2x358xf32, #tpu.memory_space<vmem>>, vector<2x256xf32>
    %c0_174 = arith.constant 0 : index
    %c37_175 = arith.constant 37 : index
    %454 = vector.load %arg6[%c0_174, %c37_175] : memref<2x358xf32, #tpu.memory_space<vmem>>, vector<2x256xf32>
    %c19_176 = arith.constant 19 : index
    %455 = memref.load %arg1[%c19_176] : memref<98xf32, #tpu.memory_space<smem>>
    %456 = vector.broadcast %455 : f32 to vector<2x256xf32>
    %457 = arith.mulf %456, %453 : vector<2x256xf32>
    %458 = arith.addf %452, %457 : vector<2x256xf32>
    %c68_177 = arith.constant 68 : index
    %459 = memref.load %arg1[%c68_177] : memref<98xf32, #tpu.memory_space<smem>>
    %460 = vector.broadcast %459 : f32 to vector<2x256xf32>
    %461 = arith.mulf %460, %454 : vector<2x256xf32>
    %462 = arith.addf %458, %461 : vector<2x256xf32>
    %c0_178 = arith.constant 0 : index
    %c53_179 = arith.constant 53 : index
    %463 = vector.load %arg5[%c0_178, %c53_179] : memref<2x358xf32, #tpu.memory_space<vmem>>, vector<2x256xf32>
    %c0_180 = arith.constant 0 : index
    %c53_181 = arith.constant 53 : index
    %464 = vector.load %arg6[%c0_180, %c53_181] : memref<2x358xf32, #tpu.memory_space<vmem>>, vector<2x256xf32>
    %c26 = arith.constant 26 : index
    %465 = memref.load %arg1[%c26] : memref<98xf32, #tpu.memory_space<smem>>
    %466 = vector.broadcast %465 : f32 to vector<2x256xf32>
    %467 = arith.mulf %466, %463 : vector<2x256xf32>
    %468 = arith.addf %462, %467 : vector<2x256xf32>
    %c75 = arith.constant 75 : index
    %469 = memref.load %arg1[%c75] : memref<98xf32, #tpu.memory_space<smem>>
    %470 = vector.broadcast %469 : f32 to vector<2x256xf32>
    %471 = arith.mulf %470, %464 : vector<2x256xf32>
    %472 = arith.addf %468, %471 : vector<2x256xf32>
    %c0_182 = arith.constant 0 : index
    %c69 = arith.constant 69 : index
    %473 = vector.load %arg5[%c0_182, %c69] : memref<2x358xf32, #tpu.memory_space<vmem>>, vector<2x256xf32>
    %c0_183 = arith.constant 0 : index
    %c69_184 = arith.constant 69 : index
    %474 = vector.load %arg6[%c0_183, %c69_184] : memref<2x358xf32, #tpu.memory_space<vmem>>, vector<2x256xf32>
    %c33_185 = arith.constant 33 : index
    %475 = memref.load %arg1[%c33_185] : memref<98xf32, #tpu.memory_space<smem>>
    %476 = vector.broadcast %475 : f32 to vector<2x256xf32>
    %477 = arith.mulf %476, %473 : vector<2x256xf32>
    %478 = arith.addf %472, %477 : vector<2x256xf32>
    %c82_186 = arith.constant 82 : index
    %479 = memref.load %arg1[%c82_186] : memref<98xf32, #tpu.memory_space<smem>>
    %480 = vector.broadcast %479 : f32 to vector<2x256xf32>
    %481 = arith.mulf %480, %474 : vector<2x256xf32>
    %482 = arith.addf %478, %481 : vector<2x256xf32>
    %c0_187 = arith.constant 0 : index
    %c85_188 = arith.constant 85 : index
    %483 = vector.load %arg5[%c0_187, %c85_188] : memref<2x358xf32, #tpu.memory_space<vmem>>, vector<2x256xf32>
    %c0_189 = arith.constant 0 : index
    %c85_190 = arith.constant 85 : index
    %484 = vector.load %arg6[%c0_189, %c85_190] : memref<2x358xf32, #tpu.memory_space<vmem>>, vector<2x256xf32>
    %c40 = arith.constant 40 : index
    %485 = memref.load %arg1[%c40] : memref<98xf32, #tpu.memory_space<smem>>
    %486 = vector.broadcast %485 : f32 to vector<2x256xf32>
    %487 = arith.mulf %486, %483 : vector<2x256xf32>
    %488 = arith.addf %482, %487 : vector<2x256xf32>
    %c89 = arith.constant 89 : index
    %489 = memref.load %arg1[%c89] : memref<98xf32, #tpu.memory_space<smem>>
    %490 = vector.broadcast %489 : f32 to vector<2x256xf32>
    %491 = arith.mulf %490, %484 : vector<2x256xf32>
    %492 = arith.addf %488, %491 : vector<2x256xf32>
    %c0_191 = arith.constant 0 : index
    %c101 = arith.constant 101 : index
    %493 = vector.load %arg5[%c0_191, %c101] : memref<2x358xf32, #tpu.memory_space<vmem>>, vector<2x256xf32>
    %c0_192 = arith.constant 0 : index
    %c101_193 = arith.constant 101 : index
    %494 = vector.load %arg6[%c0_192, %c101_193] : memref<2x358xf32, #tpu.memory_space<vmem>>, vector<2x256xf32>
    %c47 = arith.constant 47 : index
    %495 = memref.load %arg1[%c47] : memref<98xf32, #tpu.memory_space<smem>>
    %496 = vector.broadcast %495 : f32 to vector<2x256xf32>
    %497 = arith.mulf %496, %493 : vector<2x256xf32>
    %498 = arith.addf %492, %497 : vector<2x256xf32>
    %c96_194 = arith.constant 96 : index
    %499 = memref.load %arg1[%c96_194] : memref<98xf32, #tpu.memory_space<smem>>
    %500 = vector.broadcast %499 : f32 to vector<2x256xf32>
    %501 = arith.mulf %500, %494 : vector<2x256xf32>
    %502 = arith.addf %498, %501 : vector<2x256xf32>
    %c0_i32_195 = arith.constant 0 : i32
    %503 = vector.broadcast %c0_i32_195 : i32 to vector<1x256xi32>
    %504 = arith.cmpi sge, %34, %503 : vector<1x256xi32>
    %c14_i32 = arith.constant 14 : i32
    %505 = vector.broadcast %c14_i32 : i32 to vector<1x256xi32>
    %506 = arith.cmpi slt, %34, %505 : vector<1x256xi32>
    %507 = arith.andi %504, %506 : vector<1x256xi1>
    %cst_196 = arith.constant 0.000000e+00 : f32
    %508 = vector.shape_cast %507 : vector<1x256xi1> to vector<1x256xi1>
    %509 = vector.broadcast %508 : vector<1x256xi1> to vector<2x256xi1>
    %510 = vector.broadcast %cst_196 : f32 to vector<2x256xf32>
    %511 = arith.select %509, %502, %510 : vector<2x256xi1>, vector<2x256xf32>
    %512 = arith.addf %431, %511 : vector<2x256xf32>
    %cst_197 = arith.constant 0.000000e+00 : f32
    %513 = vector.broadcast %cst_197 : f32 to vector<2x256xf32>
    %c0_198 = arith.constant 0 : index
    %c6 = arith.constant 6 : index
    %514 = vector.load %arg5[%c0_198, %c6] : memref<2x358xf32, #tpu.memory_space<vmem>>, vector<2x256xf32>
    %c0_199 = arith.constant 0 : index
    %c6_200 = arith.constant 6 : index
    %515 = vector.load %arg6[%c0_199, %c6_200] : memref<2x358xf32, #tpu.memory_space<vmem>>, vector<2x256xf32>
    %c6_201 = arith.constant 6 : index
    %516 = memref.load %arg1[%c6_201] : memref<98xf32, #tpu.memory_space<smem>>
    %517 = vector.broadcast %516 : f32 to vector<2x256xf32>
    %518 = arith.mulf %517, %514 : vector<2x256xf32>
    %519 = arith.addf %513, %518 : vector<2x256xf32>
    %c55 = arith.constant 55 : index
    %520 = memref.load %arg1[%c55] : memref<98xf32, #tpu.memory_space<smem>>
    %521 = vector.broadcast %520 : f32 to vector<2x256xf32>
    %522 = arith.mulf %521, %515 : vector<2x256xf32>
    %523 = arith.addf %519, %522 : vector<2x256xf32>
    %c0_202 = arith.constant 0 : index
    %c22_203 = arith.constant 22 : index
    %524 = vector.load %arg5[%c0_202, %c22_203] : memref<2x358xf32, #tpu.memory_space<vmem>>, vector<2x256xf32>
    %c0_204 = arith.constant 0 : index
    %c22_205 = arith.constant 22 : index
    %525 = vector.load %arg6[%c0_204, %c22_205] : memref<2x358xf32, #tpu.memory_space<vmem>>, vector<2x256xf32>
    %c13 = arith.constant 13 : index
    %526 = memref.load %arg1[%c13] : memref<98xf32, #tpu.memory_space<smem>>
    %527 = vector.broadcast %526 : f32 to vector<2x256xf32>
    %528 = arith.mulf %527, %524 : vector<2x256xf32>
    %529 = arith.addf %523, %528 : vector<2x256xf32>
    %c62 = arith.constant 62 : index
    %530 = memref.load %arg1[%c62] : memref<98xf32, #tpu.memory_space<smem>>
    %531 = vector.broadcast %530 : f32 to vector<2x256xf32>
    %532 = arith.mulf %531, %525 : vector<2x256xf32>
    %533 = arith.addf %529, %532 : vector<2x256xf32>
    %c0_206 = arith.constant 0 : index
    %c38_207 = arith.constant 38 : index
    %534 = vector.load %arg5[%c0_206, %c38_207] : memref<2x358xf32, #tpu.memory_space<vmem>>, vector<2x256xf32>
    %c0_208 = arith.constant 0 : index
    %c38_209 = arith.constant 38 : index
    %535 = vector.load %arg6[%c0_208, %c38_209] : memref<2x358xf32, #tpu.memory_space<vmem>>, vector<2x256xf32>
    %c20_210 = arith.constant 20 : index
    %536 = memref.load %arg1[%c20_210] : memref<98xf32, #tpu.memory_space<smem>>
    %537 = vector.broadcast %536 : f32 to vector<2x256xf32>
    %538 = arith.mulf %537, %534 : vector<2x256xf32>
    %539 = arith.addf %533, %538 : vector<2x256xf32>
    %c69_211 = arith.constant 69 : index
    %540 = memref.load %arg1[%c69_211] : memref<98xf32, #tpu.memory_space<smem>>
    %541 = vector.broadcast %540 : f32 to vector<2x256xf32>
    %542 = arith.mulf %541, %535 : vector<2x256xf32>
    %543 = arith.addf %539, %542 : vector<2x256xf32>
    %c0_212 = arith.constant 0 : index
    %c54_213 = arith.constant 54 : index
    %544 = vector.load %arg5[%c0_212, %c54_213] : memref<2x358xf32, #tpu.memory_space<vmem>>, vector<2x256xf32>
    %c0_214 = arith.constant 0 : index
    %c54_215 = arith.constant 54 : index
    %545 = vector.load %arg6[%c0_214, %c54_215] : memref<2x358xf32, #tpu.memory_space<vmem>>, vector<2x256xf32>
    %c27 = arith.constant 27 : index
    %546 = memref.load %arg1[%c27] : memref<98xf32, #tpu.memory_space<smem>>
    %547 = vector.broadcast %546 : f32 to vector<2x256xf32>
    %548 = arith.mulf %547, %544 : vector<2x256xf32>
    %549 = arith.addf %543, %548 : vector<2x256xf32>
    %c76 = arith.constant 76 : index
    %550 = memref.load %arg1[%c76] : memref<98xf32, #tpu.memory_space<smem>>
    %551 = vector.broadcast %550 : f32 to vector<2x256xf32>
    %552 = arith.mulf %551, %545 : vector<2x256xf32>
    %553 = arith.addf %549, %552 : vector<2x256xf32>
    %c0_216 = arith.constant 0 : index
    %c70_217 = arith.constant 70 : index
    %554 = vector.load %arg5[%c0_216, %c70_217] : memref<2x358xf32, #tpu.memory_space<vmem>>, vector<2x256xf32>
    %c0_218 = arith.constant 0 : index
    %c70_219 = arith.constant 70 : index
    %555 = vector.load %arg6[%c0_218, %c70_219] : memref<2x358xf32, #tpu.memory_space<vmem>>, vector<2x256xf32>
    %c34_220 = arith.constant 34 : index
    %556 = memref.load %arg1[%c34_220] : memref<98xf32, #tpu.memory_space<smem>>
    %557 = vector.broadcast %556 : f32 to vector<2x256xf32>
    %558 = arith.mulf %557, %554 : vector<2x256xf32>
    %559 = arith.addf %553, %558 : vector<2x256xf32>
    %c83_221 = arith.constant 83 : index
    %560 = memref.load %arg1[%c83_221] : memref<98xf32, #tpu.memory_space<smem>>
    %561 = vector.broadcast %560 : f32 to vector<2x256xf32>
    %562 = arith.mulf %561, %555 : vector<2x256xf32>
    %563 = arith.addf %559, %562 : vector<2x256xf32>
    %c0_222 = arith.constant 0 : index
    %c86_223 = arith.constant 86 : index
    %564 = vector.load %arg5[%c0_222, %c86_223] : memref<2x358xf32, #tpu.memory_space<vmem>>, vector<2x256xf32>
    %c0_224 = arith.constant 0 : index
    %c86_225 = arith.constant 86 : index
    %565 = vector.load %arg6[%c0_224, %c86_225] : memref<2x358xf32, #tpu.memory_space<vmem>>, vector<2x256xf32>
    %c41 = arith.constant 41 : index
    %566 = memref.load %arg1[%c41] : memref<98xf32, #tpu.memory_space<smem>>
    %567 = vector.broadcast %566 : f32 to vector<2x256xf32>
    %568 = arith.mulf %567, %564 : vector<2x256xf32>
    %569 = arith.addf %563, %568 : vector<2x256xf32>
    %c90 = arith.constant 90 : index
    %570 = memref.load %arg1[%c90] : memref<98xf32, #tpu.memory_space<smem>>
    %571 = vector.broadcast %570 : f32 to vector<2x256xf32>
    %572 = arith.mulf %571, %565 : vector<2x256xf32>
    %573 = arith.addf %569, %572 : vector<2x256xf32>
    %c0_226 = arith.constant 0 : index
    %c102 = arith.constant 102 : index
    %574 = vector.load %arg5[%c0_226, %c102] : memref<2x358xf32, #tpu.memory_space<vmem>>, vector<2x256xf32>
    %c0_227 = arith.constant 0 : index
    %c102_228 = arith.constant 102 : index
    %575 = vector.load %arg6[%c0_227, %c102_228] : memref<2x358xf32, #tpu.memory_space<vmem>>, vector<2x256xf32>
    %c48_229 = arith.constant 48 : index
    %576 = memref.load %arg1[%c48_229] : memref<98xf32, #tpu.memory_space<smem>>
    %577 = vector.broadcast %576 : f32 to vector<2x256xf32>
    %578 = arith.mulf %577, %574 : vector<2x256xf32>
    %579 = arith.addf %573, %578 : vector<2x256xf32>
    %c97_230 = arith.constant 97 : index
    %580 = memref.load %arg1[%c97_230] : memref<98xf32, #tpu.memory_space<smem>>
    %581 = vector.broadcast %580 : f32 to vector<2x256xf32>
    %582 = arith.mulf %581, %575 : vector<2x256xf32>
    %583 = arith.addf %579, %582 : vector<2x256xf32>
    %c0_i32_231 = arith.constant 0 : i32
    %584 = vector.broadcast %c0_i32_231 : i32 to vector<1x256xi32>
    %585 = arith.cmpi sge, %34, %584 : vector<1x256xi32>
    %c13_i32 = arith.constant 13 : i32
    %586 = vector.broadcast %c13_i32 : i32 to vector<1x256xi32>
    %587 = arith.cmpi slt, %34, %586 : vector<1x256xi32>
    %588 = arith.andi %585, %587 : vector<1x256xi1>
    %cst_232 = arith.constant 0.000000e+00 : f32
    %589 = vector.shape_cast %588 : vector<1x256xi1> to vector<1x256xi1>
    %590 = vector.broadcast %589 : vector<1x256xi1> to vector<2x256xi1>
    %591 = vector.broadcast %cst_232 : f32 to vector<2x256xf32>
    %592 = arith.select %590, %583, %591 : vector<2x256xi1>, vector<2x256xf32>
    %593 = arith.addf %512, %592 : vector<2x256xf32>
    %c0_233 = arith.constant 0 : index
    %594 = memref.load %arg2[%c0_233] : memref<1xf32, #tpu.memory_space<smem>>
    %595 = vector.broadcast %594 : f32 to vector<2x256xf32>
    %596 = arith.addf %593, %595 : vector<2x256xf32>
    %597 = arith.negf %596 : vector<2x256xf32>
    %598 = math.exp %597 : vector<2x256xf32>
    %cst_234 = arith.constant 1.000000e+00 : f32
    %599 = vector.broadcast %cst_234 : f32 to vector<2x256xf32>
    %600 = arith.addf %599, %598 : vector<2x256xf32>
    %601 = arith.divf %599, %600 : vector<2x256xf32>
    %602 = vector.shape_cast %601 : vector<2x256xf32> to vector<2x1x256xf32>
    %c0_i32_235 = arith.constant 0 : i32
    %c4_i32_236 = arith.constant 4 : i32
    %603 = arith.muli %c0_i32_235, %c4_i32_236 : i32
    %604 = tpu.assume_multiple %603, 4 : i32
    %c0_237 = arith.constant 0 : index
    %605 = arith.index_cast %604 : i32 to index
    %c0_238 = arith.constant 0 : index
    %606 = vector.load %arg3[%c0_237, %605, %c0_238] : memref<2x4x256xf32, #tpu.memory_space<vmem>>, vector<2x4x256xf32>
    %607 = vector.broadcast %602 : vector<2x1x256xf32> to vector<2x4x256xf32>
    %608 = arith.mulf %606, %607 : vector<2x4x256xf32>
    %c0_239 = arith.constant 0 : index
    %609 = arith.index_cast %604 : i32 to index
    %c0_240 = arith.constant 0 : index
    %610 = vector.load %arg4[%c0_239, %609, %c0_240] : memref<2x4x256xf32, #tpu.memory_space<vmem>>, vector<2x4x256xf32>
    tpu.vector_store %arg4[%c0_239, %609, %c0_240], %608 {strides = array<i32>} : memref<2x4x256xf32, #tpu.memory_space<vmem>>, vector<2x4x256xf32>,
    %c1_i32_241 = arith.constant 1 : i32
    return
  }
  func.func @transform_0(%arg0: i32) -> i32 {
    %c0_i32 = arith.constant 0 : i32
    %c0_i32_0 = arith.constant 0 : i32
    return %c0_i32 : i32
  }
  func.func @transform_1(%arg0: i32) -> i32 {
    %c0_i32 = arith.constant 0 : i32
    %c0_i32_0 = arith.constant 0 : i32
    return %c0_i32 : i32
  }
  func.func @transform_2(%arg0: i32) -> (i32, i32, i32) {
    %c0_i32 = arith.constant 0 : i32
    %c0_i32_0 = arith.constant 0 : i32
    %c0_i32_1 = arith.constant 0 : i32
    return %arg0, %c0_i32, %c0_i32_0 : i32, i32, i32
  }
  func.func @transform_3(%arg0: i32) -> (i32, i32, i32) {
    %c0_i32 = arith.constant 0 : i32
    %c0_i32_0 = arith.constant 0 : i32
    %c0_i32_1 = arith.constant 0 : i32
    return %arg0, %c0_i32, %c0_i32_0 : i32, i32, i32
  }
}

</mosaic_0001>

<llo_original>
// kernel: tpu_custom_call.1
$region0: #{tpu_custom_call.1}
  #allocation0 [shape = 'u32[]', space=smem, size = 0x4, offset = 0x4, fixed_abs, tag = 'smem constant byte address 0x4 - core index']
  #allocation1 [shape = 'u32[144,128]{1,0:T(1,128)}', space=vmem, size = 0x12000, scoped, tag = 'internal scratch']
  #allocation2 [shape = 'f32[2,358]{1,0:T(2,128)}', space=vmem, size = 0xc00, scoped, tag = 'scratch operand']
  #allocation3 [shape = 'f32[2,358]{1,0:T(2,128)}', space=vmem, size = 0xc00, scoped, tag = 'scratch operand']
  #allocation4 [shape = 'f32[1]{0:T(128)S(6)}', space=smem, size = 0x200, scoped, tag = 'scoped memory for tpu_custom_call.1']
  %s0 = inlined_call_operand.vmem [shape: f32[98], index: 0, kind: input, shape index: {}]
  %s1 = inlined_call_operand.<no memory space> [shape: f32[1], index: 1, kind: input, shape index: {}]
  %s2 = inlined_call_operand.hbm [shape: f32[2,4,256], index: 2, kind: input, shape index: {}]
  %s3 = inlined_call_operand.hbm [shape: f32[2,4,256], index: 3, kind: output, shape index: {}]
  %s4 = sld [smem:[#allocation0]]
  $region30: #{tpu_custom_call.1} parent=0
    _
  %s6 = ssub.s32 1, %s4
  %s7 = scalar_select 0, %s6, %s4
  %8 = sst [smem:[#allocation4]] %s1
  $region1: #{tpu_custom_call.1} parent=0
    #allocation5 [shape = 'u8[512]{0}', space=smem, size = 0x200, scoped, tag = 'input window, operand 0, single buffered']
    #allocation6 [shape = 's32[1]{0}', space=sflag, size = 0x4, scoped, tag = 'scoped memory for tpu_custom_call.1']
    #allocation7 [shape = 's32[1]{0}', space=sflag, size = 0x4, scoped, tag = 'scoped memory for tpu_custom_call.1']
    #allocation8 [shape = 's32[1]{0}', space=sflag, size = 0x4, scoped, tag = 'scoped memory for tpu_custom_call.1']
    #allocation9 [shape = 'u8[8192]{0}', space=vmem, size = 0x2000, scoped, tag = 'input window, operand 2, single buffered']
    #allocation10 [shape = 'u8[8192]{0}', space=vmem, size = 0x2000, scoped, tag = 'output window, operand 0, single buffered']
    %9 = vsyncpa [#allocation8], 0
    %10 = vsyncpa [#allocation6], 0
    %11 = vsyncpa [#allocation7], 0
    // Predicated region
    $region2: #{tpu_custom_call.1} parent=1 // pred_check
      _
    $region3: #{tpu_custom_call.1} parent=1 // pred_check_branch
      %13 = sbr.rel (0) target = $region5
    $region4: #{tpu_custom_call.1} parent=1 // pred_region
      %s15 = ssub.s32 16, 16
      %16 = vsyncadd [#allocation8], %s15
      %s18 = sshll.u32 %s0, 4
      %s19 = int_to_ptr.vmem [resolvable:$true] %s18
      %21 = dma.vmem_to_smem %s19, 16, [#allocation5], [#allocation8]
    $region5: #{tpu_custom_call.1} parent=1 // pred_fallthru
      _
    // Predicated region
    $region6: #{tpu_custom_call.1} parent=1 // pred_check
      _
    $region7: #{tpu_custom_call.1} parent=1 // pred_check_branch
      %23 = sbr.rel (0) target = $region9
    $region8: #{tpu_custom_call.1} parent=1 // pred_region
      _
    $region9: #{tpu_custom_call.1} parent=1 // pred_fallthru
      _
    // Predicated region
    $region10: #{tpu_custom_call.1} parent=1 // pred_check
      _
    $region11: #{tpu_custom_call.1} parent=1 // pred_check_branch
      %25 = sbr.rel (0) target = $region13
    $region12: #{tpu_custom_call.1} parent=1 // pred_region
      %s27 = ssub.s32 256, 256
      %28 = vsyncadd [#allocation6], %s27
      %s29 = sshll.u32 [#allocation9], 4
      %s30 = int_to_ptr.vmem [resolvable:$true] %s29
      %35 = dma.hbm_to_vmem [thread:$0]  %s2, 256, %s30, [#allocation6], 128, 128, 8
    $region13: #{tpu_custom_call.1} parent=1 // pred_fallthru
      _
    // Predicated region
    $region14: #{tpu_custom_call.1} parent=1 // pred_check
      _
    $region15: #{tpu_custom_call.1} parent=1 // pred_check_branch
      %37 = sbr.rel (0) target = $region17
    $region16: #{tpu_custom_call.1} parent=1 // pred_region
      %38 = dma.done [#allocation8], 16
    $region17: #{tpu_custom_call.1} parent=1 // pred_fallthru
      _
    // Predicated region
    $region18: #{tpu_custom_call.1} parent=1 // pred_check
      _
    $region19: #{tpu_custom_call.1} parent=1 // pred_check_branch
      %40 = sbr.rel (0) target = $region21
    $region20: #{tpu_custom_call.1} parent=1 // pred_region
      %41 = dma.done [#allocation6], 256
    $region21: #{tpu_custom_call.1} parent=1 // pred_fallthru
      _
    %42 = sfence
    %s43 = smul.u32 0, 2
    %s44 = smul.addr %s43, 4
    %s45 = scalar_lea.vmem [#allocation9], %s44
    %v46 = vld [vmem:[%s45] sm:$0xff]
    %v47 = vld [vmem:[%s45 + $0x8] sm:$0xff]
    %v50 = vcombine.high %v46, %v46
    %v51 = vcombine.high %v47, %v47
    %vm54 = vcmask 1043456
    %v55 = vsel %vm54, %v46, 0.0
    %v56 = vrot.slane %v55, 4
    %v57 = vadd.f32 %v55, %v56
    %v58 = vrot.slane %v57, 2
    %v59 = vadd.f32 %v57, %v58
    %v60 = vrot.slane %v59, 1
    %v61 = vadd.f32 %v59, %v60
    %v62 = vsel %vm54, %v50, 0.0
    %v63 = vrot.slane %v62, 4
    %v64 = vadd.f32 %v62, %v63
    %v65 = vrot.slane %v64, 2
    %v66 = vadd.f32 %v64, %v65
    %v67 = vrot.slane %v66, 1
    %v68 = vadd.f32 %v66, %v67
    %v69 = vsel %vm54, %v47, 0.0
    %v70 = vrot.slane %v69, 4
    %v71 = vadd.f32 %v69, %v70
    %v72 = vrot.slane %v71, 2
    %v73 = vadd.f32 %v71, %v72
    %v74 = vrot.slane %v73, 1
    %v75 = vadd.f32 %v73, %v74
    %v76 = vsel %vm54, %v51, 0.0
    %v77 = vrot.slane %v76, 4
    %v78 = vadd.f32 %v76, %v77
    %v79 = vrot.slane %v78, 2
    %v80 = vadd.f32 %v78, %v79
    %v81 = vrot.slane %v80, 1
    %v82 = vadd.f32 %v80, %v81
    %v83 = vadd.f32 %v61, 0.0
    %v84 = vadd.f32 %v68, 0.0
    %v85 = vadd.f32 %v75, 0.0
    %v86 = vadd.f32 %v82, 0.0
    %v87 = vsel %vm54, %v46, -inf
    %v88 = vrot.slane %v87, 4
    %v89 = vmax.f32 %v87, %v88
    %v90 = vrot.slane %v89, 2
    %v91 = vmax.f32 %v89, %v90
    %v92 = vrot.slane %v91, 1
    %v93 = vmax.f32 %v91, %v92
    %v94 = vsel %vm54, %v50, -inf
    %v95 = vrot.slane %v94, 4
    %v96 = vmax.f32 %v94, %v95
    %v97 = vrot.slane %v96, 2
    %v98 = vmax.f32 %v96, %v97
    %v99 = vrot.slane %v98, 1
    %v100 = vmax.f32 %v98, %v99
    %v101 = vsel %vm54, %v47, -inf
    %v102 = vrot.slane %v101, 4
    %v103 = vmax.f32 %v101, %v102
    %v104 = vrot.slane %v103, 2
    %v105 = vmax.f32 %v103, %v104
    %v106 = vrot.slane %v105, 1
    %v107 = vmax.f32 %v105, %v106
    %v108 = vsel %vm54, %v51, -inf
    %v109 = vrot.slane %v108, 4
    %v110 = vmax.f32 %v108, %v109
    %v111 = vrot.slane %v110, 2
    %v112 = vmax.f32 %v110, %v111
    %v113 = vrot.slane %v112, 1
    %v114 = vmax.f32 %v112, %v113
    %v115 = vmul.f32 %v83, 0.25
    %v116 = vmul.f32 %v84, 0.25
    %v117 = vmul.f32 %v85, 0.25
    %v118 = vmul.f32 %v86, 0.25
    %vm119 = vcmask 1041408
    %vm120 = vcmask 1043458
    %vm121 = vmor %vm120, %vm119
    %vm122 = vcmask 832516
    %vm123 = vmor %vm122, %vm121
    %124 = vst.msk [vmem:[#allocation2] sm:$0x3f] %vm123, 0.0
    %125 = vst.msk [vmem:[#allocation3] sm:$0x3f] %vm123, 0.0
    %v130 = vcombine.low %v115, %v116
    %v132 = vunpack.c.l.s4 1983009808
    %v133 = vunpack.c.0.s8 %v132
    %v134 = vlaneseq
    %v135 = vshrl.u32 %v134, 7
    %v136 = vsub.s32 %v133, %v135
    %v137 = vrot.slane %v130, %v136
    %v138 = vcombine.low %v117, %v118
    %v140 = vunpack.c.l.s4 1983009808
    %v141 = vunpack.c.0.s8 %v140
    %v142 = vlaneseq
    %v143 = vshrl.u32 %v142, 7
    %v144 = vsub.s32 %v141, %v143
    %v145 = vrot.slane %v138, %v144
    %vm146 = vcmask 1044484
    %v147 = vsel %vm146, %v137, %v137
    %vm148 = vcmask 1046534
    %v149 = vsel %vm148, %v137, %v147
    %v150 = vrot.slane %v145, 7
    %vm151 = vcmask 1041409
    %v152 = vsel %vm151, %v150, %v149
    %vm153 = vcmask 1043459
    %v154 = vsel %vm153, %v150, %v152
    %vm155 = vcmask 1045509
    %v156 = vsel %vm155, %v150, %v154
    %vm157 = vcmask 1047559
    %v158 = vsel %vm157, %v150, %v156
    %159 = vrot.lane.b32.xlu0 %v158, 51
    %v160 = vpop.permute.xlu0 %159
    %v161 = vrot.slane %v160, 6
    %vm162 = vcmask 416768
    %v163 = vsel %vm162, %v161, %v160
    %vm165 = vcmask 1041816
    %vm166 = vmor %vm120, %vm165
    %vm167 = vcmask 414724
    %vm168 = vmor %vm167, %vm166
    %169 = vst.msk [vmem:[#allocation2] sm:$0x3f] %vm168, %v163
    %v174 = vcombine.low %v93, %v100
    %v176 = vunpack.c.l.s4 1983009808
    %v177 = vunpack.c.0.s8 %v176
    %v178 = vlaneseq
    %v179 = vshrl.u32 %v178, 7
    %v180 = vsub.s32 %v177, %v179
    %v181 = vrot.slane %v174, %v180
    %v182 = vcombine.low %v107, %v114
    %v184 = vunpack.c.l.s4 1983009808
    %v185 = vunpack.c.0.s8 %v184
    %v186 = vlaneseq
    %v187 = vshrl.u32 %v186, 7
    %v188 = vsub.s32 %v185, %v187
    %v189 = vrot.slane %v182, %v188
    %v190 = vsel %vm146, %v181, %v181
    %v191 = vsel %vm148, %v181, %v190
    %v192 = vrot.slane %v189, 7
    %v193 = vsel %vm151, %v192, %v191
    %v194 = vsel %vm153, %v192, %v193
    %v195 = vsel %vm155, %v192, %v194
    %v196 = vsel %vm157, %v192, %v195
    %197 = vrot.lane.b32.xlu0 %v196, 51
    %v198 = vpop.permute.xlu0 %197
    %v199 = vrot.slane %v198, 6
    %v200 = vsel %vm162, %v199, %v198
    %202 = vst.msk [vmem:[#allocation3] sm:$0x3f] %vm168, %v200
    %v203 = vlaneseq
    %v204 = vand.u32 %v203, 127
    %v205 = vadd.s32 %v204, 128
    %vm206 = vcmp.lt.s32.totalorder %v204, 0
    %v207 = vsub.s32 0, %v204
    %v208 = vsel %vm206, %v207, %v204
    %v209 = vshrl.u32 %v208, 4
    %v210 = vand.u32 %v208, 15
    %v211 = vsub.s32 0, %v210
    %v212 = vsel %vm206, %v211, %v210
    %vm213 = vcmp.lt.s32.totalorder %v205, 0
    %v214 = vsub.s32 0, %v205
    %v215 = vsel %vm213, %v214, %v205
    %v216 = vshrl.u32 %v215, 4
    %v217 = vand.u32 %v215, 15
    %v218 = vsub.s32 0, %v217
    %v219 = vsel %vm213, %v218, %v217
    %vm220 = vcmp.ne.s32.totalorder %v212, 0
    %vm221 = vcmp.ne.s32.totalorder %v219, 0
    %vm222 = vcmp.lt.s32.totalorder %v212, 0
    %vm223 = vcmp.lt.s32.totalorder %v219, 0
    %vm224 = vmand %vm222, %vm220
    %vm225 = vmand %vm223, %vm221
    %v226 = vadd.s32 %v212, 16
    %v227 = vadd.s32 %v219, 16
    %v228 = vsel %vm224, %v226, %v212
    %v229 = vsel %vm225, %v227, %v219
    %v230 = vld [vmem:[#allocation2] sm:$0xf]
    %v231 = vld [vmem:[#allocation3] sm:$0xf]
    %s232 = sld [smem:[#allocation5]]
    %v233 = vstv %s232
    %v234 = vmul.f32 %v233, %v230
    %v235 = vadd.f32 %v234, 0.0
    %s236 = sld [smem:[#allocation5 + $0x31]]
    %v237 = vstv %s236
    %v238 = vmul.f32 %v237, %v231
    %v239 = vadd.f32 %v235, %v238
    %v240 = vld [vmem:[#allocation2] sm:$0x3f]
    %v241 = vld [vmem:[#allocation3] sm:$0x3f]
    %s242 = sld [smem:[#allocation5 + $0x7]]
    %v243 = vstv %s242
    %v244 = vmul.f32 %v243, %v240
    %246 = vrot.lane.b32.xlu0 %v244, 112
    %v247 = vpop.permute.xlu0 %246
    %v248 = vrot.slane %v247, 2
    %vm249 = vcmask 916480
    %v250 = vsel %vm249, %v247, %v248
    %v252 = vadd.f32 %v239, %v250
    %s253 = sld [smem:[#allocation5 + $0x38]]
    %v254 = vstv %s253
    %v255 = vmul.f32 %v254, %v241
    %257 = vrot.lane.b32.xlu0 %v255, 112
    %v258 = vpop.permute.xlu0 %257
    %v259 = vrot.slane %v258, 2
    %v260 = vsel %vm249, %v258, %v259
    %v262 = vadd.f32 %v252, %v260
    %s263 = sld [smem:[#allocation5 + $0xe]]
    %v264 = vstv %s263
    %v265 = vmul.f32 %v264, %v240
    %267 = vrot.lane.b32.xlu0 %v265, 96
    %v268 = vpop.permute.xlu0 %267
    %v269 = vrot.slane %v268, 2
    %vm270 = vcmask 785408
    %v271 = vsel %vm270, %v268, %v269
    %v273 = vadd.f32 %v262, %v271
    %s274 = sld [smem:[#allocation5 + $0x3f]]
    %v275 = vstv %s274
    %v276 = vmul.f32 %v275, %v241
    %278 = vrot.lane.b32.xlu0 %v276, 96
    %v279 = vpop.permute.xlu0 %278
    %v280 = vrot.slane %v279, 2
    %v281 = vsel %vm270, %v279, %v280
    %v283 = vadd.f32 %v273, %v281
    %s284 = sld [smem:[#allocation5 + $0x15]]
    %v285 = vstv %s284
    %v286 = vmul.f32 %v285, %v240
    %288 = vrot.lane.b32.xlu0 %v286, 80
    %v289 = vpop.permute.xlu0 %288
    %v290 = vrot.slane %v289, 2
    %vm291 = vcmask 654336
    %v292 = vsel %vm291, %v289, %v290
    %v294 = vadd.f32 %v283, %v292
    %s295 = sld [smem:[#allocation5 + $0x46]]
    %v296 = vstv %s295
    %v297 = vmul.f32 %v296, %v241
    %299 = vrot.lane.b32.xlu0 %v297, 80
    %v300 = vpop.permute.xlu0 %299
    %v301 = vrot.slane %v300, 2
    %v302 = vsel %vm291, %v300, %v301
    %v304 = vadd.f32 %v294, %v302
    %s305 = sld [smem:[#allocation5 + $0x1c]]
    %v306 = vstv %s305
    %v307 = vmul.f32 %v306, %v240
    %309 = vrot.lane.b32.xlu0 %v307, 64
    %v310 = vpop.permute.xlu0 %309
    %v311 = vrot.slane %v310, 2
    %vm312 = vcmask 523264
    %v313 = vsel %vm312, %v310, %v311
    %v315 = vadd.f32 %v304, %v313
    %s316 = sld [smem:[#allocation5 + $0x4d]]
    %v317 = vstv %s316
    %v318 = vmul.f32 %v317, %v241
    %320 = vrot.lane.b32.xlu0 %v318, 64
    %v321 = vpop.permute.xlu0 %320
    %v322 = vrot.slane %v321, 2
    %v323 = vsel %vm312, %v321, %v322
    %v325 = vadd.f32 %v315, %v323
    %s326 = sld [smem:[#allocation5 + $0x23]]
    %v327 = vstv %s326
    %v328 = vmul.f32 %v327, %v240
    %330 = vrot.lane.b32.xlu0 %v328, 48
    %v331 = vpop.permute.xlu0 %330
    %v332 = vrot.slane %v331, 2
    %vm333 = vcmask 392192
    %v334 = vsel %vm333, %v331, %v332
    %v336 = vadd.f32 %v325, %v334
    %s337 = sld [smem:[#allocation5 + $0x54]]
    %v338 = vstv %s337
    %v339 = vmul.f32 %v338, %v241
    %341 = vrot.lane.b32.xlu0 %v339, 48
    %v342 = vpop.permute.xlu0 %341
    %v343 = vrot.slane %v342, 2
    %v344 = vsel %vm333, %v342, %v343
    %v346 = vadd.f32 %v336, %v344
    %s347 = sld [smem:[#allocation5 + $0x2a]]
    %v348 = vstv %s347
    %v349 = vmul.f32 %v348, %v240
    %351 = vrot.lane.b32.xlu0 %v349, 32
    %v352 = vpop.permute.xlu0 %351
    %v353 = vrot.slane %v352, 2
    %vm354 = vcmask 261120
    %v355 = vsel %vm354, %v352, %v353
    %v357 = vadd.f32 %v346, %v355
    %s358 = sld [smem:[#allocation5 + $0x5b]]
    %v359 = vstv %s358
    %v360 = vmul.f32 %v359, %v241
    %362 = vrot.lane.b32.xlu0 %v360, 32
    %v363 = vpop.permute.xlu0 %362
    %v364 = vrot.slane %v363, 2
    %v365 = vsel %vm354, %v363, %v364
    %v367 = vadd.f32 %v357, %v365
    %vm368 = vcmp.ge.s32.totalorder %v228, 3
    %vm369 = vcmp.ge.s32.totalorder %v229, 3
    %vm370 = vcmp.lt.s32.totalorder %v228, 16
    %vm371 = vcmp.lt.s32.totalorder %v229, 16
    %vm372 = vmand %vm368, %vm370
    %vm373 = vmand %vm369, %vm371
    %v374 = vsel %vm372, 1, 0
    %v375 = vsel %vm373, 1, 0
    %vm376 = vcmp.eq.s32.totalorder %v374, 1
    %vm377 = vcmp.eq.s32.totalorder %v375, 1
    %v380 = vunpack.c.l.s4 1983009808
    %v381 = vunpack.c.0.s8 %v380
    %v382 = vlaneseq
    %v383 = vshrl.u32 %v382, 7
    %v384 = vsub.s32 %v381, %v383
    %v385 = vrot.slane %v367, %v384
    %v386 = vcombine.high %v385, %v385
    %v389 = vsel %vm376, %v385, 0.0
    %v390 = vsel %vm377, %v386, 0.0
    %v391 = vadd.f32 %v389, 0.0
    %v392 = vadd.f32 %v390, 0.0
    %v393 = vld [vmem:[#allocation2] sm:$0x3f]
    %v394 = vld [vmem:[#allocation3] sm:$0x3f]
    %s395 = sld [smem:[#allocation5 + $0x1]]
    %v396 = vstv %s395
    %v397 = vmul.f32 %v396, %v393
    %v398 = vadd.f32 %v397, 0.0
    %s399 = sld [smem:[#allocation5 + $0x32]]
    %v400 = vstv %s399
    %v401 = vmul.f32 %v400, %v394
    %v402 = vadd.f32 %v398, %v401
    %s403 = sld [smem:[#allocation5 + $0x8]]
    %v404 = vstv %s403
    %v405 = vmul.f32 %v404, %v393
    %407 = vrot.lane.b32.xlu0 %v405, 112
    %v408 = vpop.permute.xlu0 %407
    %v409 = vrot.slane %v408, 2
    %v410 = vsel %vm249, %v408, %v409
    %v412 = vadd.f32 %v402, %v410
    %s413 = sld [smem:[#allocation5 + $0x39]]
    %v414 = vstv %s413
    %v415 = vmul.f32 %v414, %v394
    %417 = vrot.lane.b32.xlu0 %v415, 112
    %v418 = vpop.permute.xlu0 %417
    %v419 = vrot.slane %v418, 2
    %v420 = vsel %vm249, %v418, %v419
    %v422 = vadd.f32 %v412, %v420
    %s423 = sld [smem:[#allocation5 + $0xf]]
    %v424 = vstv %s423
    %v425 = vmul.f32 %v424, %v393
    %427 = vrot.lane.b32.xlu0 %v425, 96
    %v428 = vpop.permute.xlu0 %427
    %v429 = vrot.slane %v428, 2
    %v430 = vsel %vm270, %v428, %v429
    %v432 = vadd.f32 %v422, %v430
    %s433 = sld [smem:[#allocation5 + $0x40]]
    %v434 = vstv %s433
    %v435 = vmul.f32 %v434, %v394
    %437 = vrot.lane.b32.xlu0 %v435, 96
    %v438 = vpop.permute.xlu0 %437
    %v439 = vrot.slane %v438, 2
    %v440 = vsel %vm270, %v438, %v439
    %v442 = vadd.f32 %v432, %v440
    %s443 = sld [smem:[#allocation5 + $0x16]]
    %v444 = vstv %s443
    %v445 = vmul.f32 %v444, %v393
    %447 = vrot.lane.b32.xlu0 %v445, 80
    %v448 = vpop.permute.xlu0 %447
    %v449 = vrot.slane %v448, 2
    %v450 = vsel %vm291, %v448, %v449
    %v452 = vadd.f32 %v442, %v450
    %s453 = sld [smem:[#allocation5 + $0x47]]
    %v454 = vstv %s453
    %v455 = vmul.f32 %v454, %v394
    %457 = vrot.lane.b32.xlu0 %v455, 80
    %v458 = vpop.permute.xlu0 %457
    %v459 = vrot.slane %v458, 2
    %v460 = vsel %vm291, %v458, %v459
    %v462 = vadd.f32 %v452, %v460
    %s463 = sld [smem:[#allocation5 + $0x1d]]
    %v464 = vstv %s463
    %v465 = vmul.f32 %v464, %v393
    %467 = vrot.lane.b32.xlu0 %v465, 64
    %v468 = vpop.permute.xlu0 %467
    %v469 = vrot.slane %v468, 2
    %v470 = vsel %vm312, %v468, %v469
    %v472 = vadd.f32 %v462, %v470
    %s473 = sld [smem:[#allocation5 + $0x4e]]
    %v474 = vstv %s473
    %v475 = vmul.f32 %v474, %v394
    %477 = vrot.lane.b32.xlu0 %v475, 64
    %v478 = vpop.permute.xlu0 %477
    %v479 = vrot.slane %v478, 2
    %v480 = vsel %vm312, %v478, %v479
    %v482 = vadd.f32 %v472, %v480
    %s483 = sld [smem:[#allocation5 + $0x24]]
    %v484 = vstv %s483
    %v485 = vmul.f32 %v484, %v393
    %487 = vrot.lane.b32.xlu0 %v485, 48
    %v488 = vpop.permute.xlu0 %487
    %v489 = vrot.slane %v488, 2
    %v490 = vsel %vm333, %v488, %v489
    %v492 = vadd.f32 %v482, %v490
    %s493 = sld [smem:[#allocation5 + $0x55]]
    %v494 = vstv %s493
    %v495 = vmul.f32 %v494, %v394
    %497 = vrot.lane.b32.xlu0 %v495, 48
    %v498 = vpop.permute.xlu0 %497
    %v499 = vrot.slane %v498, 2
    %v500 = vsel %vm333, %v498, %v499
    %v502 = vadd.f32 %v492, %v500
    %s503 = sld [smem:[#allocation5 + $0x2b]]
    %v504 = vstv %s503
    %v505 = vmul.f32 %v504, %v393
    %507 = vrot.lane.b32.xlu0 %v505, 32
    %v508 = vpop.permute.xlu0 %507
    %v509 = vrot.slane %v508, 2
    %v510 = vsel %vm354, %v508, %v509
    %v512 = vadd.f32 %v502, %v510
    %s513 = sld [smem:[#allocation5 + $0x5c]]
    %v514 = vstv %s513
    %v515 = vmul.f32 %v514, %v394
    %517 = vrot.lane.b32.xlu0 %v515, 32
    %v518 = vpop.permute.xlu0 %517
    %v519 = vrot.slane %v518, 2
    %v520 = vsel %vm354, %v518, %v519
    %v522 = vadd.f32 %v512, %v520
    %vm523 = vcmp.ge.s32.totalorder %v228, 2
    %vm524 = vcmp.ge.s32.totalorder %v229, 2
    %vm525 = vmand %vm523, %vm370
    %vm526 = vmand %vm524, %vm371
    %v527 = vsel %vm525, 1, 0
    %v528 = vsel %vm526, 1, 0
    %vm529 = vcmp.eq.s32.totalorder %v527, 1
    %vm530 = vcmp.eq.s32.totalorder %v528, 1
    %v532 = vcombine.high %v522, %v522
    %v534 = vunpack.c.l.s4 1983009808
    %v535 = vunpack.c.0.s8 %v534
    %v536 = vlaneseq
    %v537 = vshrl.u32 %v536, 7
    %v538 = vsub.s32 %v535, %v537
    %v539 = vrot.slane %v522, %v538
    %v541 = vunpack.c.l.s4 1983009808
    %v542 = vunpack.c.0.s8 %v541
    %v543 = vlaneseq
    %v544 = vshrl.u32 %v543, 7
    %v545 = vsub.s32 %v542, %v544
    %v546 = vrot.slane %v532, %v545
    %v547 = vcombine.high %v539, %v539
    %548 = vrot.lane.b32.xlu0 %v539, 127
    %v549 = vpop.permute.xlu0 %548
    %550 = vrot.lane.b32.xlu0 %v547, 127
    %v551 = vpop.permute.xlu0 %550
    %552 = vrot.lane.b32.xlu0 %v546, 127
    %v553 = vpop.permute.xlu0 %552
    %vm554 = vcmask 1039360
    %v555 = vsel %vm554, %v549, %v551
    %v556 = vsel %vm554, %v551, %v553
    %v559 = vsel %vm529, %v555, 0.0
    %v560 = vsel %vm530, %v556, 0.0
    %v561 = vadd.f32 %v391, %v559
    %v562 = vadd.f32 %v392, %v560
    %v563 = vld [vmem:[#allocation2] sm:$0x3f]
    %v564 = vld [vmem:[#allocation3] sm:$0x3f]
    %s565 = sld [smem:[#allocation5 + $0x2]]
    %v566 = vstv %s565
    %v567 = vmul.f32 %v566, %v563
    %v568 = vadd.f32 %v567, 0.0
    %s569 = sld [smem:[#allocation5 + $0x33]]
    %v570 = vstv %s569
    %v571 = vmul.f32 %v570, %v564
    %v572 = vadd.f32 %v568, %v571
    %s573 = sld [smem:[#allocation5 + $0x9]]
    %v574 = vstv %s573
    %v575 = vmul.f32 %v574, %v563
    %577 = vrot.lane.b32.xlu0 %v575, 112
    %v578 = vpop.permute.xlu0 %577
    %v579 = vrot.slane %v578, 2
    %v580 = vsel %vm249, %v578, %v579
    %v582 = vadd.f32 %v572, %v580
    %s583 = sld [smem:[#allocation5 + $0x3a]]
    %v584 = vstv %s583
    %v585 = vmul.f32 %v584, %v564
    %587 = vrot.lane.b32.xlu0 %v585, 112
    %v588 = vpop.permute.xlu0 %587
    %v589 = vrot.slane %v588, 2
    %v590 = vsel %vm249, %v588, %v589
    %v592 = vadd.f32 %v582, %v590
    %s593 = sld [smem:[#allocation5 + $0x10]]
    %v594 = vstv %s593
    %v595 = vmul.f32 %v594, %v563
    %597 = vrot.lane.b32.xlu0 %v595, 96
    %v598 = vpop.permute.xlu0 %597
    %v599 = vrot.slane %v598, 2
    %v600 = vsel %vm270, %v598, %v599
    %v602 = vadd.f32 %v592, %v600
    %s603 = sld [smem:[#allocation5 + $0x41]]
    %v604 = vstv %s603
    %v605 = vmul.f32 %v604, %v564
    %607 = vrot.lane.b32.xlu0 %v605, 96
    %v608 = vpop.permute.xlu0 %607
    %v609 = vrot.slane %v608, 2
    %v610 = vsel %vm270, %v608, %v609
    %v612 = vadd.f32 %v602, %v610
    %s613 = sld [smem:[#allocation5 + $0x17]]
    %v614 = vstv %s613
    %v615 = vmul.f32 %v614, %v563
    %617 = vrot.lane.b32.xlu0 %v615, 80
    %v618 = vpop.permute.xlu0 %617
    %v619 = vrot.slane %v618, 2
    %v620 = vsel %vm291, %v618, %v619
    %v622 = vadd.f32 %v612, %v620
    %s623 = sld [smem:[#allocation5 + $0x48]]
    %v624 = vstv %s623
    %v625 = vmul.f32 %v624, %v564
    %627 = vrot.lane.b32.xlu0 %v625, 80
    %v628 = vpop.permute.xlu0 %627
    %v629 = vrot.slane %v628, 2
    %v630 = vsel %vm291, %v628, %v629
    %v632 = vadd.f32 %v622, %v630
    %s633 = sld [smem:[#allocation5 + $0x1e]]
    %v634 = vstv %s633
    %v635 = vmul.f32 %v634, %v563
    %637 = vrot.lane.b32.xlu0 %v635, 64
    %v638 = vpop.permute.xlu0 %637
    %v639 = vrot.slane %v638, 2
    %v640 = vsel %vm312, %v638, %v639
    %v642 = vadd.f32 %v632, %v640
    %s643 = sld [smem:[#allocation5 + $0x4f]]
    %v644 = vstv %s643
    %v645 = vmul.f32 %v644, %v564
    %647 = vrot.lane.b32.xlu0 %v645, 64
    %v648 = vpop.permute.xlu0 %647
    %v649 = vrot.slane %v648, 2
    %v650 = vsel %vm312, %v648, %v649
    %v652 = vadd.f32 %v642, %v650
    %s653 = sld [smem:[#allocation5 + $0x25]]
    %v654 = vstv %s653
    %v655 = vmul.f32 %v654, %v563
    %657 = vrot.lane.b32.xlu0 %v655, 48
    %v658 = vpop.permute.xlu0 %657
    %v659 = vrot.slane %v658, 2
    %v660 = vsel %vm333, %v658, %v659
    %v662 = vadd.f32 %v652, %v660
    %s663 = sld [smem:[#allocation5 + $0x56]]
    %v664 = vstv %s663
    %v665 = vmul.f32 %v664, %v564
    %667 = vrot.lane.b32.xlu0 %v665, 48
    %v668 = vpop.permute.xlu0 %667
    %v669 = vrot.slane %v668, 2
    %v670 = vsel %vm333, %v668, %v669
    %v672 = vadd.f32 %v662, %v670
    %s673 = sld [smem:[#allocation5 + $0x2c]]
    %v674 = vstv %s673
    %v675 = vmul.f32 %v674, %v563
    %677 = vrot.lane.b32.xlu0 %v675, 32
    %v678 = vpop.permute.xlu0 %677
    %v679 = vrot.slane %v678, 2
    %v680 = vsel %vm354, %v678, %v679
    %v682 = vadd.f32 %v672, %v680
    %s683 = sld [smem:[#allocation5 + $0x5d]]
    %v684 = vstv %s683
    %v685 = vmul.f32 %v684, %v564
    %687 = vrot.lane.b32.xlu0 %v685, 32
    %v688 = vpop.permute.xlu0 %687
    %v689 = vrot.slane %v688, 2
    %v690 = vsel %vm354, %v688, %v689
    %v692 = vadd.f32 %v682, %v690
    %vm693 = vcmp.ge.s32.totalorder %v228, 1
    %vm694 = vcmp.ge.s32.totalorder %v229, 1
    %vm695 = vmand %vm693, %vm370
    %vm696 = vmand %vm694, %vm371
    %v697 = vsel %vm695, 1, 0
    %v698 = vsel %vm696, 1, 0
    %vm699 = vcmp.eq.s32.totalorder %v697, 1
    %vm700 = vcmp.eq.s32.totalorder %v698, 1
    %v702 = vcombine.high %v692, %v692
    %v704 = vunpack.c.l.s4 1983009808
    %v705 = vunpack.c.0.s8 %v704
    %v706 = vlaneseq
    %v707 = vshrl.u32 %v706, 7
    %v708 = vsub.s32 %v705, %v707
    %v709 = vrot.slane %v692, %v708
    %v711 = vunpack.c.l.s4 1983009808
    %v712 = vunpack.c.0.s8 %v711
    %v713 = vlaneseq
    %v714 = vshrl.u32 %v713, 7
    %v715 = vsub.s32 %v712, %v714
    %v716 = vrot.slane %v702, %v715
    %v717 = vcombine.high %v709, %v709
    %718 = vrot.lane.b32.xlu0 %v709, 126
    %v719 = vpop.permute.xlu0 %718
    %720 = vrot.lane.b32.xlu0 %v717, 126
    %v721 = vpop.permute.xlu0 %720
    %722 = vrot.lane.b32.xlu0 %v716, 126
    %v723 = vpop.permute.xlu0 %722
    %vm724 = vcmask 1031168
    %v725 = vsel %vm724, %v719, %v721
    %v726 = vsel %vm724, %v721, %v723
    %v729 = vsel %vm699, %v725, 0.0
    %v730 = vsel %vm700, %v726, 0.0
    %v731 = vadd.f32 %v561, %v729
    %v732 = vadd.f32 %v562, %v730
    %v733 = vld [vmem:[#allocation2] sm:$0x3f]
    %v734 = vld [vmem:[#allocation3] sm:$0x3f]
    %s735 = sld [smem:[#allocation5 + $0x3]]
    %v736 = vstv %s735
    %v737 = vmul.f32 %v736, %v733
    %v738 = vadd.f32 %v737, 0.0
    %s739 = sld [smem:[#allocation5 + $0x34]]
    %v740 = vstv %s739
    %v741 = vmul.f32 %v740, %v734
    %v742 = vadd.f32 %v738, %v741
    %s743 = sld [smem:[#allocation5 + $0xa]]
    %v744 = vstv %s743
    %v745 = vmul.f32 %v744, %v733
    %747 = vrot.lane.b32.xlu0 %v745, 112
    %v748 = vpop.permute.xlu0 %747
    %v749 = vrot.slane %v748, 2
    %v750 = vsel %vm249, %v748, %v749
    %v752 = vadd.f32 %v742, %v750
    %s753 = sld [smem:[#allocation5 + $0x3b]]
    %v754 = vstv %s753
    %v755 = vmul.f32 %v754, %v734
    %757 = vrot.lane.b32.xlu0 %v755, 112
    %v758 = vpop.permute.xlu0 %757
    %v759 = vrot.slane %v758, 2
    %v760 = vsel %vm249, %v758, %v759
    %v762 = vadd.f32 %v752, %v760
    %s763 = sld [smem:[#allocation5 + $0x11]]
    %v764 = vstv %s763
    %v765 = vmul.f32 %v764, %v733
    %767 = vrot.lane.b32.xlu0 %v765, 96
    %v768 = vpop.permute.xlu0 %767
    %v769 = vrot.slane %v768, 2
    %v770 = vsel %vm270, %v768, %v769
    %v772 = vadd.f32 %v762, %v770
    %s773 = sld [smem:[#allocation5 + $0x42]]
    %v774 = vstv %s773
    %v775 = vmul.f32 %v774, %v734
    %777 = vrot.lane.b32.xlu0 %v775, 96
    %v778 = vpop.permute.xlu0 %777
    %v779 = vrot.slane %v778, 2
    %v780 = vsel %vm270, %v778, %v779
    %v782 = vadd.f32 %v772, %v780
    %s783 = sld [smem:[#allocation5 + $0x18]]
    %v784 = vstv %s783
    %v785 = vmul.f32 %v784, %v733
    %787 = vrot.lane.b32.xlu0 %v785, 80
    %v788 = vpop.permute.xlu0 %787
    %v789 = vrot.slane %v788, 2
    %v790 = vsel %vm291, %v788, %v789
    %v792 = vadd.f32 %v782, %v790
    %s793 = sld [smem:[#allocation5 + $0x49]]
    %v794 = vstv %s793
    %v795 = vmul.f32 %v794, %v734
    %797 = vrot.lane.b32.xlu0 %v795, 80
    %v798 = vpop.permute.xlu0 %797
    %v799 = vrot.slane %v798, 2
    %v800 = vsel %vm291, %v798, %v799
    %v802 = vadd.f32 %v792, %v800
    %s803 = sld [smem:[#allocation5 + $0x1f]]
    %v804 = vstv %s803
    %v805 = vmul.f32 %v804, %v733
    %807 = vrot.lane.b32.xlu0 %v805, 64
    %v808 = vpop.permute.xlu0 %807
    %v809 = vrot.slane %v808, 2
    %v810 = vsel %vm312, %v808, %v809
    %v812 = vadd.f32 %v802, %v810
    %s813 = sld [smem:[#allocation5 + $0x50]]
    %v814 = vstv %s813
    %v815 = vmul.f32 %v814, %v734
    %817 = vrot.lane.b32.xlu0 %v815, 64
    %v818 = vpop.permute.xlu0 %817
    %v819 = vrot.slane %v818, 2
    %v820 = vsel %vm312, %v818, %v819
    %v822 = vadd.f32 %v812, %v820
    %s823 = sld [smem:[#allocation5 + $0x26]]
    %v824 = vstv %s823
    %v825 = vmul.f32 %v824, %v733
    %827 = vrot.lane.b32.xlu0 %v825, 48
    %v828 = vpop.permute.xlu0 %827
    %v829 = vrot.slane %v828, 2
    %v830 = vsel %vm333, %v828, %v829
    %v832 = vadd.f32 %v822, %v830
    %s833 = sld [smem:[#allocation5 + $0x57]]
    %v834 = vstv %s833
    %v835 = vmul.f32 %v834, %v734
    %837 = vrot.lane.b32.xlu0 %v835, 48
    %v838 = vpop.permute.xlu0 %837
    %v839 = vrot.slane %v838, 2
    %v840 = vsel %vm333, %v838, %v839
    %v842 = vadd.f32 %v832, %v840
    %s843 = sld [smem:[#allocation5 + $0x2d]]
    %v844 = vstv %s843
    %v845 = vmul.f32 %v844, %v733
    %847 = vrot.lane.b32.xlu0 %v845, 32
    %v848 = vpop.permute.xlu0 %847
    %v849 = vrot.slane %v848, 2
    %v850 = vsel %vm354, %v848, %v849
    %v852 = vadd.f32 %v842, %v850
    %s853 = sld [smem:[#allocation5 + $0x5e]]
    %v854 = vstv %s853
    %v855 = vmul.f32 %v854, %v734
    %857 = vrot.lane.b32.xlu0 %v855, 32
    %v858 = vpop.permute.xlu0 %857
    %v859 = vrot.slane %v858, 2
    %v860 = vsel %vm354, %v858, %v859
    %v862 = vadd.f32 %v852, %v860
    %v864 = vcombine.high %v862, %v862
    %v866 = vunpack.c.l.s4 1983009808
    %v867 = vunpack.c.0.s8 %v866
    %v868 = vlaneseq
    %v869 = vshrl.u32 %v868, 7
    %v870 = vsub.s32 %v867, %v869
    %v871 = vrot.slane %v862, %v870
    %v873 = vunpack.c.l.s4 1983009808
    %v874 = vunpack.c.0.s8 %v873
    %v875 = vlaneseq
    %v876 = vshrl.u32 %v875, 7
    %v877 = vsub.s32 %v874, %v876
    %v878 = vrot.slane %v864, %v877
    %v879 = vcombine.high %v871, %v871
    %880 = vrot.lane.b32.xlu0 %v871, 125
    %v881 = vpop.permute.xlu0 %880
    %882 = vrot.lane.b32.xlu0 %v879, 125
    %v883 = vpop.permute.xlu0 %882
    %884 = vrot.lane.b32.xlu0 %v878, 125
    %v885 = vpop.permute.xlu0 %884
    %vm886 = vcmask 1022976
    %v887 = vsel %vm886, %v881, %v883
    %v888 = vsel %vm886, %v883, %v885
    %v891 = vadd.f32 %v731, %v887
    %v892 = vadd.f32 %v732, %v888
    %v893 = vld [vmem:[#allocation2] sm:$0x3f]
    %v894 = vld [vmem:[#allocation3] sm:$0x3f]
    %s895 = sld [smem:[#allocation5 + $0x4]]
    %v896 = vstv %s895
    %v897 = vmul.f32 %v896, %v893
    %v898 = vadd.f32 %v897, 0.0
    %s899 = sld [smem:[#allocation5 + $0x35]]
    %v900 = vstv %s899
    %v901 = vmul.f32 %v900, %v894
    %v902 = vadd.f32 %v898, %v901
    %s903 = sld [smem:[#allocation5 + $0xb]]
    %v904 = vstv %s903
    %v905 = vmul.f32 %v904, %v893
    %907 = vrot.lane.b32.xlu0 %v905, 112
    %v908 = vpop.permute.xlu0 %907
    %v909 = vrot.slane %v908, 2
    %v910 = vsel %vm249, %v908, %v909
    %v912 = vadd.f32 %v902, %v910
    %s913 = sld [smem:[#allocation5 + $0x3c]]
    %v914 = vstv %s913
    %v915 = vmul.f32 %v914, %v894
    %917 = vrot.lane.b32.xlu0 %v915, 112
    %v918 = vpop.permute.xlu0 %917
    %v919 = vrot.slane %v918, 2
    %v920 = vsel %vm249, %v918, %v919
    %v922 = vadd.f32 %v912, %v920
    %s923 = sld [smem:[#allocation5 + $0x12]]
    %v924 = vstv %s923
    %v925 = vmul.f32 %v924, %v893
    %927 = vrot.lane.b32.xlu0 %v925, 96
    %v928 = vpop.permute.xlu0 %927
    %v929 = vrot.slane %v928, 2
    %v930 = vsel %vm270, %v928, %v929
    %v932 = vadd.f32 %v922, %v930
    %s933 = sld [smem:[#allocation5 + $0x43]]
    %v934 = vstv %s933
    %v935 = vmul.f32 %v934, %v894
    %937 = vrot.lane.b32.xlu0 %v935, 96
    %v938 = vpop.permute.xlu0 %937
    %v939 = vrot.slane %v938, 2
    %v940 = vsel %vm270, %v938, %v939
    %v942 = vadd.f32 %v932, %v940
    %s943 = sld [smem:[#allocation5 + $0x19]]
    %v944 = vstv %s943
    %v945 = vmul.f32 %v944, %v893
    %947 = vrot.lane.b32.xlu0 %v945, 80
    %v948 = vpop.permute.xlu0 %947
    %v949 = vrot.slane %v948, 2
    %v950 = vsel %vm291, %v948, %v949
    %v952 = vadd.f32 %v942, %v950
    %s953 = sld [smem:[#allocation5 + $0x4a]]
    %v954 = vstv %s953
    %v955 = vmul.f32 %v954, %v894
    %957 = vrot.lane.b32.xlu0 %v955, 80
    %v958 = vpop.permute.xlu0 %957
    %v959 = vrot.slane %v958, 2
    %v960 = vsel %vm291, %v958, %v959
    %v962 = vadd.f32 %v952, %v960
    %s963 = sld [smem:[#allocation5 + $0x20]]
    %v964 = vstv %s963
    %v965 = vmul.f32 %v964, %v893
    %967 = vrot.lane.b32.xlu0 %v965, 64
    %v968 = vpop.permute.xlu0 %967
    %v969 = vrot.slane %v968, 2
    %v970 = vsel %vm312, %v968, %v969
    %v972 = vadd.f32 %v962, %v970
    %s973 = sld [smem:[#allocation5 + $0x51]]
    %v974 = vstv %s973
    %v975 = vmul.f32 %v974, %v894
    %977 = vrot.lane.b32.xlu0 %v975, 64
    %v978 = vpop.permute.xlu0 %977
    %v979 = vrot.slane %v978, 2
    %v980 = vsel %vm312, %v978, %v979
    %v982 = vadd.f32 %v972, %v980
    %s983 = sld [smem:[#allocation5 + $0x27]]
    %v984 = vstv %s983
    %v985 = vmul.f32 %v984, %v893
    %987 = vrot.lane.b32.xlu0 %v985, 48
    %v988 = vpop.permute.xlu0 %987
    %v989 = vrot.slane %v988, 2
    %v990 = vsel %vm333, %v988, %v989
    %v992 = vadd.f32 %v982, %v990
    %s993 = sld [smem:[#allocation5 + $0x58]]
    %v994 = vstv %s993
    %v995 = vmul.f32 %v994, %v894
    %997 = vrot.lane.b32.xlu0 %v995, 48
    %v998 = vpop.permute.xlu0 %997
    %v999 = vrot.slane %v998, 2
    %v1000 = vsel %vm333, %v998, %v999
    %v1002 = vadd.f32 %v992, %v1000
    %s1003 = sld [smem:[#allocation5 + $0x2e]]
    %v1004 = vstv %s1003
    %v1005 = vmul.f32 %v1004, %v893
    %1007 = vrot.lane.b32.xlu0 %v1005, 32
    %v1008 = vpop.permute.xlu0 %1007
    %v1009 = vrot.slane %v1008, 2
    %v1010 = vsel %vm354, %v1008, %v1009
    %v1012 = vadd.f32 %v1002, %v1010
    %s1013 = sld [smem:[#allocation5 + $0x5f]]
    %v1014 = vstv %s1013
    %v1015 = vmul.f32 %v1014, %v894
    %1017 = vrot.lane.b32.xlu0 %v1015, 32
    %v1018 = vpop.permute.xlu0 %1017
    %v1019 = vrot.slane %v1018, 2
    %v1020 = vsel %vm354, %v1018, %v1019
    %v1022 = vadd.f32 %v1012, %v1020
    %vm1023 = vcmp.ge.s32.totalorder %v228, 0
    %vm1024 = vcmp.ge.s32.totalorder %v229, 0
    %vm1025 = vcmp.lt.s32.totalorder %v228, 15
    %vm1026 = vcmp.lt.s32.totalorder %v229, 15
    %vm1027 = vmand %vm1023, %vm1025
    %vm1028 = vmand %vm1024, %vm1026
    %v1029 = vsel %vm1027, 1, 0
    %v1030 = vsel %vm1028, 1, 0
    %vm1031 = vcmp.eq.s32.totalorder %v1029, 1
    %vm1032 = vcmp.eq.s32.totalorder %v1030, 1
    %v1034 = vcombine.high %v1022, %v1022
    %v1036 = vunpack.c.l.s4 1983009808
    %v1037 = vunpack.c.0.s8 %v1036
    %v1038 = vlaneseq
    %v1039 = vshrl.u32 %v1038, 7
    %v1040 = vsub.s32 %v1037, %v1039
    %v1041 = vrot.slane %v1022, %v1040
    %v1043 = vunpack.c.l.s4 1983009808
    %v1044 = vunpack.c.0.s8 %v1043
    %v1045 = vlaneseq
    %v1046 = vshrl.u32 %v1045, 7
    %v1047 = vsub.s32 %v1044, %v1046
    %v1048 = vrot.slane %v1034, %v1047
    %v1049 = vcombine.high %v1041, %v1041
    %1050 = vrot.lane.b32.xlu0 %v1041, 124
    %v1051 = vpop.permute.xlu0 %1050
    %1052 = vrot.lane.b32.xlu0 %v1049, 124
    %v1053 = vpop.permute.xlu0 %1052
    %1054 = vrot.lane.b32.xlu0 %v1048, 124
    %v1055 = vpop.permute.xlu0 %1054
    %vm1056 = vcmask 1014784
    %v1057 = vsel %vm1056, %v1051, %v1053
    %v1058 = vsel %vm1056, %v1053, %v1055
    %v1061 = vsel %vm1031, %v1057, 0.0
    %v1062 = vsel %vm1032, %v1058, 0.0
    %v1063 = vadd.f32 %v891, %v1061
    %v1064 = vadd.f32 %v892, %v1062
    %v1065 = vld [vmem:[#allocation2] sm:$0x3f]
    %v1066 = vld [vmem:[#allocation3] sm:$0x3f]
    %s1067 = sld [smem:[#allocation5 + $0x5]]
    %v1068 = vstv %s1067
    %v1069 = vmul.f32 %v1068, %v1065
    %v1070 = vadd.f32 %v1069, 0.0
    %s1071 = sld [smem:[#allocation5 + $0x36]]
    %v1072 = vstv %s1071
    %v1073 = vmul.f32 %v1072, %v1066
    %v1074 = vadd.f32 %v1070, %v1073
    %s1075 = sld [smem:[#allocation5 + $0xc]]
    %v1076 = vstv %s1075
    %v1077 = vmul.f32 %v1076, %v1065
    %1079 = vrot.lane.b32.xlu0 %v1077, 112
    %v1080 = vpop.permute.xlu0 %1079
    %v1081 = vrot.slane %v1080, 2
    %v1082 = vsel %vm249, %v1080, %v1081
    %v1084 = vadd.f32 %v1074, %v1082
    %s1085 = sld [smem:[#allocation5 + $0x3d]]
    %v1086 = vstv %s1085
    %v1087 = vmul.f32 %v1086, %v1066
    %1089 = vrot.lane.b32.xlu0 %v1087, 112
    %v1090 = vpop.permute.xlu0 %1089
    %v1091 = vrot.slane %v1090, 2
    %v1092 = vsel %vm249, %v1090, %v1091
    %v1094 = vadd.f32 %v1084, %v1092
    %s1095 = sld [smem:[#allocation5 + $0x13]]
    %v1096 = vstv %s1095
    %v1097 = vmul.f32 %v1096, %v1065
    %1099 = vrot.lane.b32.xlu0 %v1097, 96
    %v1100 = vpop.permute.xlu0 %1099
    %v1101 = vrot.slane %v1100, 2
    %v1102 = vsel %vm270, %v1100, %v1101
    %v1104 = vadd.f32 %v1094, %v1102
    %s1105 = sld [smem:[#allocation5 + $0x44]]
    %v1106 = vstv %s1105
    %v1107 = vmul.f32 %v1106, %v1066
    %1109 = vrot.lane.b32.xlu0 %v1107, 96
    %v1110 = vpop.permute.xlu0 %1109
    %v1111 = vrot.slane %v1110, 2
    %v1112 = vsel %vm270, %v1110, %v1111
    %v1114 = vadd.f32 %v1104, %v1112
    %s1115 = sld [smem:[#allocation5 + $0x1a]]
    %v1116 = vstv %s1115
    %v1117 = vmul.f32 %v1116, %v1065
    %1119 = vrot.lane.b32.xlu0 %v1117, 80
    %v1120 = vpop.permute.xlu0 %1119
    %v1121 = vrot.slane %v1120, 2
    %v1122 = vsel %vm291, %v1120, %v1121
    %v1124 = vadd.f32 %v1114, %v1122
    %s1125 = sld [smem:[#allocation5 + $0x4b]]
    %v1126 = vstv %s1125
    %v1127 = vmul.f32 %v1126, %v1066
    %1129 = vrot.lane.b32.xlu0 %v1127, 80
    %v1130 = vpop.permute.xlu0 %1129
    %v1131 = vrot.slane %v1130, 2
    %v1132 = vsel %vm291, %v1130, %v1131
    %v1134 = vadd.f32 %v1124, %v1132
    %s1135 = sld [smem:[#allocation5 + $0x21]]
    %v1136 = vstv %s1135
    %v1137 = vmul.f32 %v1136, %v1065
    %1139 = vrot.lane.b32.xlu0 %v1137, 64
    %v1140 = vpop.permute.xlu0 %1139
    %v1141 = vrot.slane %v1140, 2
    %v1142 = vsel %vm312, %v1140, %v1141
    %v1144 = vadd.f32 %v1134, %v1142
    %s1145 = sld [smem:[#allocation5 + $0x52]]
    %v1146 = vstv %s1145
    %v1147 = vmul.f32 %v1146, %v1066
    %1149 = vrot.lane.b32.xlu0 %v1147, 64
    %v1150 = vpop.permute.xlu0 %1149
    %v1151 = vrot.slane %v1150, 2
    %v1152 = vsel %vm312, %v1150, %v1151
    %v1154 = vadd.f32 %v1144, %v1152
    %s1155 = sld [smem:[#allocation5 + $0x28]]
    %v1156 = vstv %s1155
    %v1157 = vmul.f32 %v1156, %v1065
    %1159 = vrot.lane.b32.xlu0 %v1157, 48
    %v1160 = vpop.permute.xlu0 %1159
    %v1161 = vrot.slane %v1160, 2
    %v1162 = vsel %vm333, %v1160, %v1161
    %v1164 = vadd.f32 %v1154, %v1162
    %s1165 = sld [smem:[#allocation5 + $0x59]]
    %v1166 = vstv %s1165
    %v1167 = vmul.f32 %v1166, %v1066
    %1169 = vrot.lane.b32.xlu0 %v1167, 48
    %v1170 = vpop.permute.xlu0 %1169
    %v1171 = vrot.slane %v1170, 2
    %v1172 = vsel %vm333, %v1170, %v1171
    %v1174 = vadd.f32 %v1164, %v1172
    %s1175 = sld [smem:[#allocation5 + $0x2f]]
    %v1176 = vstv %s1175
    %v1177 = vmul.f32 %v1176, %v1065
    %1179 = vrot.lane.b32.xlu0 %v1177, 32
    %v1180 = vpop.permute.xlu0 %1179
    %v1181 = vrot.slane %v1180, 2
    %v1182 = vsel %vm354, %v1180, %v1181
    %v1184 = vadd.f32 %v1174, %v1182
    %s1185 = sld [smem:[#allocation5 + $0x60]]
    %v1186 = vstv %s1185
    %v1187 = vmul.f32 %v1186, %v1066
    %1189 = vrot.lane.b32.xlu0 %v1187, 32
    %v1190 = vpop.permute.xlu0 %1189
    %v1191 = vrot.slane %v1190, 2
    %v1192 = vsel %vm354, %v1190, %v1191
    %v1194 = vadd.f32 %v1184, %v1192
    %vm1195 = vcmp.lt.s32.totalorder %v228, 14
    %vm1196 = vcmp.lt.s32.totalorder %v229, 14
    %vm1197 = vmand %vm1023, %vm1195
    %vm1198 = vmand %vm1024, %vm1196
    %v1199 = vsel %vm1197, 1, 0
    %v1200 = vsel %vm1198, 1, 0
    %vm1201 = vcmp.eq.s32.totalorder %v1199, 1
    %vm1202 = vcmp.eq.s32.totalorder %v1200, 1
    %v1204 = vcombine.high %v1194, %v1194
    %v1206 = vunpack.c.l.s4 1983009808
    %v1207 = vunpack.c.0.s8 %v1206
    %v1208 = vlaneseq
    %v1209 = vshrl.u32 %v1208, 7
    %v1210 = vsub.s32 %v1207, %v1209
    %v1211 = vrot.slane %v1194, %v1210
    %v1213 = vunpack.c.l.s4 1983009808
    %v1214 = vunpack.c.0.s8 %v1213
    %v1215 = vlaneseq
    %v1216 = vshrl.u32 %v1215, 7
    %v1217 = vsub.s32 %v1214, %v1216
    %v1218 = vrot.slane %v1204, %v1217
    %v1219 = vcombine.high %v1211, %v1211
    %1220 = vrot.lane.b32.xlu0 %v1211, 123
    %v1221 = vpop.permute.xlu0 %1220
    %1222 = vrot.lane.b32.xlu0 %v1219, 123
    %v1223 = vpop.permute.xlu0 %1222
    %1224 = vrot.lane.b32.xlu0 %v1218, 123
    %v1225 = vpop.permute.xlu0 %1224
    %vm1226 = vcmask 1006592
    %v1227 = vsel %vm1226, %v1221, %v1223
    %v1228 = vsel %vm1226, %v1223, %v1225
    %v1231 = vsel %vm1201, %v1227, 0.0
    %v1232 = vsel %vm1202, %v1228, 0.0
    %v1233 = vadd.f32 %v1063, %v1231
    %v1234 = vadd.f32 %v1064, %v1232
    %v1235 = vld [vmem:[#allocation2] sm:$0x3f]
    %v1236 = vld [vmem:[#allocation3] sm:$0x3f]
    %s1237 = sld [smem:[#allocation5 + $0x6]]
    %v1238 = vstv %s1237
    %v1239 = vmul.f32 %v1238, %v1235
    %v1240 = vadd.f32 %v1239, 0.0
    %s1241 = sld [smem:[#allocation5 + $0x37]]
    %v1242 = vstv %s1241
    %v1243 = vmul.f32 %v1242, %v1236
    %v1244 = vadd.f32 %v1240, %v1243
    %s1245 = sld [smem:[#allocation5 + $0xd]]
    %v1246 = vstv %s1245
    %v1247 = vmul.f32 %v1246, %v1235
    %1249 = vrot.lane.b32.xlu0 %v1247, 112
    %v1250 = vpop.permute.xlu0 %1249
    %v1251 = vrot.slane %v1250, 2
    %v1252 = vsel %vm249, %v1250, %v1251
    %v1254 = vadd.f32 %v1244, %v1252
    %s1255 = sld [smem:[#allocation5 + $0x3e]]
    %v1256 = vstv %s1255
    %v1257 = vmul.f32 %v1256, %v1236
    %1259 = vrot.lane.b32.xlu0 %v1257, 112
    %v1260 = vpop.permute.xlu0 %1259
    %v1261 = vrot.slane %v1260, 2
    %v1262 = vsel %vm249, %v1260, %v1261
    %v1264 = vadd.f32 %v1254, %v1262
    %s1265 = sld [smem:[#allocation5 + $0x14]]
    %v1266 = vstv %s1265
    %v1267 = vmul.f32 %v1266, %v1235
    %1269 = vrot.lane.b32.xlu0 %v1267, 96
    %v1270 = vpop.permute.xlu0 %1269
    %v1271 = vrot.slane %v1270, 2
    %v1272 = vsel %vm270, %v1270, %v1271
    %v1274 = vadd.f32 %v1264, %v1272
    %s1275 = sld [smem:[#allocation5 + $0x45]]
    %v1276 = vstv %s1275
    %v1277 = vmul.f32 %v1276, %v1236
    %1279 = vrot.lane.b32.xlu0 %v1277, 96
    %v1280 = vpop.permute.xlu0 %1279
    %v1281 = vrot.slane %v1280, 2
    %v1282 = vsel %vm270, %v1280, %v1281
    %v1284 = vadd.f32 %v1274, %v1282
    %s1285 = sld [smem:[#allocation5 + $0x1b]]
    %v1286 = vstv %s1285
    %v1287 = vmul.f32 %v1286, %v1235
    %1289 = vrot.lane.b32.xlu0 %v1287, 80
    %v1290 = vpop.permute.xlu0 %1289
    %v1291 = vrot.slane %v1290, 2
    %v1292 = vsel %vm291, %v1290, %v1291
    %v1294 = vadd.f32 %v1284, %v1292
    %s1295 = sld [smem:[#allocation5 + $0x4c]]
    %v1296 = vstv %s1295
    %v1297 = vmul.f32 %v1296, %v1236
    %1299 = vrot.lane.b32.xlu0 %v1297, 80
    %v1300 = vpop.permute.xlu0 %1299
    %v1301 = vrot.slane %v1300, 2
    %v1302 = vsel %vm291, %v1300, %v1301
    %v1304 = vadd.f32 %v1294, %v1302
    %s1305 = sld [smem:[#allocation5 + $0x22]]
    %v1306 = vstv %s1305
    %v1307 = vmul.f32 %v1306, %v1235
    %1309 = vrot.lane.b32.xlu0 %v1307, 64
    %v1310 = vpop.permute.xlu0 %1309
    %v1311 = vrot.slane %v1310, 2
    %v1312 = vsel %vm312, %v1310, %v1311
    %v1314 = vadd.f32 %v1304, %v1312
    %s1315 = sld [smem:[#allocation5 + $0x53]]
    %v1316 = vstv %s1315
    %v1317 = vmul.f32 %v1316, %v1236
    %1319 = vrot.lane.b32.xlu0 %v1317, 64
    %v1320 = vpop.permute.xlu0 %1319
    %v1321 = vrot.slane %v1320, 2
    %v1322 = vsel %vm312, %v1320, %v1321
    %v1324 = vadd.f32 %v1314, %v1322
    %s1325 = sld [smem:[#allocation5 + $0x29]]
    %v1326 = vstv %s1325
    %v1327 = vmul.f32 %v1326, %v1235
    %1329 = vrot.lane.b32.xlu0 %v1327, 48
    %v1330 = vpop.permute.xlu0 %1329
    %v1331 = vrot.slane %v1330, 2
    %v1332 = vsel %vm333, %v1330, %v1331
    %v1334 = vadd.f32 %v1324, %v1332
    %s1335 = sld [smem:[#allocation5 + $0x5a]]
    %v1336 = vstv %s1335
    %v1337 = vmul.f32 %v1336, %v1236
    %1339 = vrot.lane.b32.xlu0 %v1337, 48
    %v1340 = vpop.permute.xlu0 %1339
    %v1341 = vrot.slane %v1340, 2
    %v1342 = vsel %vm333, %v1340, %v1341
    %v1344 = vadd.f32 %v1334, %v1342
    %s1345 = sld [smem:[#allocation5 + $0x30]]
    %v1346 = vstv %s1345
    %v1347 = vmul.f32 %v1346, %v1235
    %1349 = vrot.lane.b32.xlu0 %v1347, 32
    %v1350 = vpop.permute.xlu0 %1349
    %v1351 = vrot.slane %v1350, 2
    %v1352 = vsel %vm354, %v1350, %v1351
    %v1354 = vadd.f32 %v1344, %v1352
    %s1355 = sld [smem:[#allocation5 + $0x61]]
    %v1356 = vstv %s1355
    %v1357 = vmul.f32 %v1356, %v1236
    %1359 = vrot.lane.b32.xlu0 %v1357, 32
    %v1360 = vpop.permute.xlu0 %1359
    %v1361 = vrot.slane %v1360, 2
    %v1362 = vsel %vm354, %v1360, %v1361
    %v1364 = vadd.f32 %v1354, %v1362
    %vm1365 = vcmp.lt.s32.totalorder %v228, 13
    %vm1366 = vcmp.lt.s32.totalorder %v229, 13
    %vm1367 = vmand %vm1023, %vm1365
    %vm1368 = vmand %vm1024, %vm1366
    %v1369 = vsel %vm1367, 1, 0
    %v1370 = vsel %vm1368, 1, 0
    %vm1371 = vcmp.eq.s32.totalorder %v1369, 1
    %vm1372 = vcmp.eq.s32.totalorder %v1370, 1
    %v1374 = vcombine.high %v1364, %v1364
    %v1376 = vunpack.c.l.s4 1983009808
    %v1377 = vunpack.c.0.s8 %v1376
    %v1378 = vlaneseq
    %v1379 = vshrl.u32 %v1378, 7
    %v1380 = vsub.s32 %v1377, %v1379
    %v1381 = vrot.slane %v1364, %v1380
    %v1383 = vunpack.c.l.s4 1983009808
    %v1384 = vunpack.c.0.s8 %v1383
    %v1385 = vlaneseq
    %v1386 = vshrl.u32 %v1385, 7
    %v1387 = vsub.s32 %v1384, %v1386
    %v1388 = vrot.slane %v1374, %v1387
    %v1389 = vcombine.high %v1381, %v1381
    %1390 = vrot.lane.b32.xlu0 %v1381, 122
    %v1391 = vpop.permute.xlu0 %1390
    %1392 = vrot.lane.b32.xlu0 %v1389, 122
    %v1393 = vpop.permute.xlu0 %1392
    %1394 = vrot.lane.b32.xlu0 %v1388, 122
    %v1395 = vpop.permute.xlu0 %1394
    %vm1396 = vcmask 998400
    %v1397 = vsel %vm1396, %v1391, %v1393
    %v1398 = vsel %vm1396, %v1393, %v1395
    %v1401 = vsel %vm1371, %v1397, 0.0
    %v1402 = vsel %vm1372, %v1398, 0.0
    %v1403 = vadd.f32 %v1233, %v1401
    %v1404 = vadd.f32 %v1234, %v1402
    %s1405 = sld [smem:[#allocation4]]
    %v1406 = vstv %s1405
    %v1407 = vadd.f32 %v1403, %v1406
    %v1408 = vadd.f32 %v1404, %v1406
    %v1409 = vxor.u32 %v1407, 2147483648
    %v1410 = vxor.u32 %v1408, 2147483648
    %v1411 = vmul.f32 %v1409, 1.442695
    %v1412 = vpow.pop %v1411
    %v1413 = vmul.f32 %v1410, 1.442695
    %v1414 = vpow.pop %v1413
    %v1415 = vadd.f32 %v1412, 1.0
    %v1416 = vadd.f32 %v1414, 1.0
    %v1417 = vrcp.pop %v1415
    %v1418 = vmul.f32 1.0, %v1417
    %v1419 = vrcp.pop %v1416
    %v1420 = vmul.f32 1.0, %v1419
    %v1423 = vcombine.low %v1418, %v1420
    %v1425 = vunpack.c.l.s4 1966171168
    %v1426 = vunpack.c.0.s8 %v1425
    %v1427 = vlaneseq
    %v1428 = vshrl.u32 %v1427, 7
    %v1429 = vsub.s32 %v1426, %v1428
    %v1430 = vrot.slane %v1423, %v1429
    %v1431 = vcombine.high %v1430, %v1430
    %v1433 = vunpack.c.l.s4 1966171168
    %v1434 = vunpack.c.0.s8 %v1433
    %v1435 = vlaneseq
    %v1436 = vshrl.u32 %v1435, 7
    %v1437 = vsub.s32 %v1434, %v1436
    %v1438 = vrot.slane %v1430, %v1437
    %v1440 = vunpack.c.l.s4 1966171168
    %v1441 = vunpack.c.0.s8 %v1440
    %v1442 = vlaneseq
    %v1443 = vshrl.u32 %v1442, 7
    %v1444 = vsub.s32 %v1441, %v1443
    %v1445 = vrot.slane %v1431, %v1444
    %v1446 = vld [vmem:[%s45] sm:$0xff]
    %v1447 = vld [vmem:[%s45 + $0x8] sm:$0xff]
    %v1448 = vlaneseq
    %v1449 = vshrl.u32 %v1448, 7
    %v1450 = vsub.s32 0, %v1449
    %v1451 = vrot.slane %v1438, %v1450
    %v1452 = vlaneseq
    %v1453 = vshrl.u32 %v1452, 7
    %v1454 = vsub.s32 1, %v1453
    %v1455 = vrot.slane %v1438, %v1454
    %v1456 = vlaneseq
    %v1457 = vshrl.u32 %v1456, 7
    %v1458 = vsub.s32 0, %v1457
    %v1459 = vrot.slane %v1445, %v1458
    %v1460 = vlaneseq
    %v1461 = vshrl.u32 %v1460, 7
    %v1462 = vsub.s32 1, %v1461
    %v1463 = vrot.slane %v1445, %v1462
    %v1464 = vcombine.low %v1451, %v1455
    %v1465 = vcombine.low %v1459, %v1463
    %v1468 = vmul.f32 %v1446, %v1464
    %v1469 = vmul.f32 %v1447, %v1465
    %s1470 = smul.addr %s43, 4
    %s1471 = scalar_lea.vmem [#allocation10], %s1470
    %1472 = vst [vmem:[%s1471] sm:$0xff] %v1468
    %1473 = vst [vmem:[%s1471 + $0x8] sm:$0xff] %v1469
    // Predicated region
    $region22: #{tpu_custom_call.1} parent=1 // pred_check
      _
    $region23: #{tpu_custom_call.1} parent=1 // pred_check_branch
      %1475 = sbr.rel (0) target = $region25
    $region24: #{tpu_custom_call.1} parent=1 // pred_region
      %s1477 = ssub.s32 256, 256
      %1478 = vsyncadd [#allocation7], %s1477
      %s1479 = sshll.u32 [#allocation10], 4
      %s1480 = int_to_ptr.vmem [resolvable:$true] %s1479
      %1485 = dma.vmem_to_hbm [thread:$0]  %s1480, 256, %s3, [#allocation7], 128, 128, 8
    $region25: #{tpu_custom_call.1} parent=1 // pred_fallthru
      _
    // Predicated region
    $region26: #{tpu_custom_call.1} parent=1 // pred_check
      _
    $region27: #{tpu_custom_call.1} parent=1 // pred_check_branch
      %1487 = sbr.rel (0) target = $region29
    $region28: #{tpu_custom_call.1} parent=1 // pred_region
      %1488 = dma.done [#allocation7], 256
    $region29: #{tpu_custom_call.1} parent=1 // pred_fallthru
      _
    %1489 = vsyncpa [#allocation6], 1
    %1490 = vsyncpa [#allocation7], 1
    %1491 = vsyncpa [#allocation8], 1

</llo_original>
